<compile_context>
chip_gen: v7x
topology: tpu7x:2x2x1
jax: 0.10.0
libtpu: 0.0.40
codegen_flags: <defaults>
</compile_context>

<pallas_src>
import math

import jax
import jax.numpy as jnp
from jax.experimental import pallas as pl
from jax.experimental.pallas import tpu as pltpu

LANE = 128
VMEM_LIMIT = 32 * 1024 * 1024


def _round_up(x, m):
    return ((x + m - 1) // m) * m


def _pick_tiles(n_rows, n_cols):
    """Choose (tile_m, tile_k) for the aggregation kernel."""
    # Row (output) tile: target 512, but keep >= 2 row tiles when the graph is
    # big enough so the "parallel" axis spans both v7x TensorCores.
    if n_rows > LANE:
        half = -(-n_rows // 2)                      # ceil(n_rows / 2)
        tile_m = min(512, _round_up(half, LANE))
    else:
        tile_m = _round_up(max(n_rows, 1), 8)       # block == full extent
    # Reduction (source) tile: target 2048 so each A DMA is multi-MiB and the
    # per-grid-step overhead is amortized; whole extent for small graphs.
    tile_k = max(LANE, min(2048, _round_up(max(n_cols, 1), LANE)))
    return tile_m, tile_k


# ---------------------------------------------------------------------------
# Stage 1: Z = (H @ W) * norm     (bf16 output, f32 MXU accumulation)
# ---------------------------------------------------------------------------
def _feat_transform_kernel(h_ref, w_ref, n_ref, z_ref):
    z = jnp.dot(h_ref[...], w_ref[...], preferred_element_type=jnp.float32)
    z_ref[...] = (z * n_ref[...]).astype(z_ref.dtype)


# ---------------------------------------------------------------------------
# Stage 2: out = relu((A @ Z) * norm + bias)   K-tiled accumulation
# ---------------------------------------------------------------------------
def _aggregate_kernel(a_ref, z_ref, ndst_ref, b_ref, o_ref, acc_ref):
    k = pl.program_id(1)

    @pl.when(k == 0)
    def _init():
        acc_ref[...] = jnp.zeros_like(acc_ref)

    # A arrives as int8 (0/1) -> cast to bf16 on the VPU (exact), then MXU dot
    # with f32 accumulation.
    a = a_ref[...].astype(jnp.bfloat16)
    acc_ref[...] += jnp.dot(a, z_ref[...], preferred_element_type=jnp.float32)

    @pl.when(k == pl.num_programs(1) - 1)
    def _finalize():
        out = acc_ref[...] * ndst_ref[...] + b_ref[...]
        o_ref[...] = jnp.maximum(out, 0.0).astype(o_ref.dtype)


@jax.jit
def gcn_layer_forward(h, weight, bias, adj, norm):
    """Pallas GCN layer: relu((A @ ((h @ W) * norm)) * norm + bias) -> bf16."""
    N, Fin = h.shape
    Fout = weight.shape[1]
    fout_pad = _round_up(Fout, LANE)

    tile_m, tile_k = _pick_tiles(N, N)
    m_pad = _round_up(N, tile_m)          # destination / output rows
    k_pad = _round_up(N, tile_k)          # source rows (reduction axis)

    # Padding is per-axis and jit-fused with the surrounding ops; A is padded
    # straight into int8 so there is no f32 full-matrix copy in the wrapper.
    # TODO(synk): for very large graphs, handle the ragged last tile in-kernel
    # (iota mask + scalar-prefetched N) instead of materializing a padded A.
    h_p = jnp.zeros((k_pad, Fin), jnp.bfloat16).at[:N, :].set(
        h.astype(jnp.bfloat16))
    nsrc_p = jnp.zeros((k_pad, 1), jnp.float32).at[:N, :].set(
        norm.astype(jnp.float32))
    ndst_p = jnp.zeros((m_pad, 1), jnp.float32).at[:N, :].set(
        norm.astype(jnp.float32))
    adj_p = jnp.zeros((m_pad, k_pad), jnp.int8).at[:N, :N].set(
        adj.astype(jnp.int8))
    w_p = jnp.zeros((Fin, fout_pad), jnp.bfloat16).at[:, :Fout].set(
        weight.astype(jnp.bfloat16))
    b_p = jnp.zeros((1, fout_pad), jnp.float32).at[0, :Fout].set(
        bias.astype(jnp.float32))

    # --- Stage 1: Z = (H @ W) * norm, computed once (hoisted out of the
    #     aggregation loop). ------------------------------------------------
    tile_z = tile_k
    z = pl.pallas_call(
        _feat_transform_kernel,
        out_shape=jax.ShapeDtypeStruct((k_pad, fout_pad), jnp.bfloat16),
        grid_spec=pltpu.PrefetchScalarGridSpec(
            num_scalar_prefetch=0,
            grid=(k_pad // tile_z,),
            in_specs=[
                pl.BlockSpec((tile_z, Fin), lambda i: (i, 0)),       # H tile
                pl.BlockSpec((Fin, fout_pad), lambda i: (0, 0)),     # W resident
                pl.BlockSpec((tile_z, 1), lambda i: (i, 0)),         # norm (src)
            ],
            out_specs=pl.BlockSpec((tile_z, fout_pad), lambda i: (i, 0)),
        ),
        compiler_params=pltpu.CompilerParams(
            dimension_semantics=("parallel",),
            vmem_limit_bytes=VMEM_LIMIT,
        ),
    )(h_p, w_p, nsrc_p)

    # --- Stage 2: out = relu((A @ Z) * norm + bias) ------------------------
    grid = (m_pad // tile_m, k_pad // tile_k)
    out = pl.pallas_call(
        _aggregate_kernel,
        out_shape=jax.ShapeDtypeStruct((m_pad, fout_pad), jnp.bfloat16),
        grid_spec=pltpu.PrefetchScalarGridSpec(
            num_scalar_prefetch=0,
            grid=grid,
            in_specs=[
                pl.BlockSpec((tile_m, tile_k), lambda i, k: (i, k)),    # A (int8)
                pl.BlockSpec((tile_k, fout_pad), lambda i, k: (k, 0)),  # Z tile
                pl.BlockSpec((tile_m, 1), lambda i, k: (i, 0)),         # norm (dst)
                pl.BlockSpec((1, fout_pad), lambda i, k: (0, 0)),       # bias
            ],
            out_specs=pl.BlockSpec((tile_m, fout_pad), lambda i, k: (i, 0)),
            scratch_shapes=[pltpu.VMEM((tile_m, fout_pad), jnp.float32)],
        ),
        compiler_params=pltpu.CompilerParams(
            dimension_semantics=("parallel", "arbitrary"),
            vmem_limit_bytes=VMEM_LIMIT,
        ),
    )(adj_p, z, ndst_p, b_p)

    return out[:N, :Fout]


def reference_forward(h, weight, bias, adj, norm):
    z = (h @ weight) * norm
    agg = adj @ z
    return jnp.maximum(agg * norm + bias[None, :], 0.0)


if __name__ == "__main__":
    # Small synthetic graph / features (exercises row, reduction and Fout
    # padding paths as well as the 2-row-tile grid).
    N, IN_FEATS, OUT_FEATS = 300, 32, 16

    key = jax.random.PRNGKey(0)
    k_h, k_w, k_b, k_adj = jax.random.split(key, 4)

    # Node features.
    h = jax.random.normal(k_h, (N, IN_FEATS), dtype=jnp.float32)

    # Parameters, matching reset_parameters(): uniform(-stdv, stdv), stdv = 1/sqrt(out_feats).
    stdv = 1.0 / math.sqrt(OUT_FEATS)
    weight = jax.random.uniform(
        k_w, (IN_FEATS, OUT_FEATS), minval=-stdv, maxval=stdv, dtype=jnp.float32)
    bias = jax.random.uniform(
        k_b, (OUT_FEATS,), minval=-stdv, maxval=stdv, dtype=jnp.float32)

    # Synthetic graph: random sparse-ish dense adjacency (0/1) plus self-loops.
    adj = (jax.random.uniform(k_adj, (N, N)) < 0.1).astype(jnp.float32)
    adj = jnp.maximum(adj, jnp.eye(N, dtype=jnp.float32))
    deg = adj.sum(axis=1, keepdims=True)              # in-degree per node, [N, 1]
    norm = 1.0 / jnp.sqrt(jnp.maximum(deg, 1.0))      # g.ndata['norm'], [N, 1]

    # TODO(synk): training-mode dropout omitted (dropout=0.0 here); it is a
    # data-independent elementwise mask and could be added via pltpu.prng_random_bits.

    out = gcn_layer_forward(h, weight, bias, adj, norm)
    out = jax.block_until_ready(out)

    ref = reference_forward(h, weight, bias, adj, norm)
    assert out.shape == (N, OUT_FEATS)
    # bf16 MXU inputs / bf16 Z / bf16 output with f32 accumulation -> compare
    # against the f32 reference at a bf16-appropriate tolerance (the adjacency
    # values themselves are 0/1, so the int8->bf16 A path is exact).
    assert jnp.allclose(out.astype(jnp.float32), ref, atol=5e-2, rtol=5e-2), \
        "Pallas output mismatch"

    print("KERNEL_OK")
</pallas_src>

<mosaic_0001>
module attributes {stable_mosaic.version = 11 : i64} {
  func.func @_feat_transform_kernel(%arg0: i32, %arg1: memref<384x32xbf16, #tpu.memory_space<vmem>>, %arg2: memref<32x128xbf16, #tpu.memory_space<vmem>>, %arg3: memref<384x1xf32, #tpu.memory_space<vmem>>, %arg4: memref<384x128xbf16, #tpu.memory_space<vmem>>) attributes {dimension_semantics = [#tpu.dimension_semantics<parallel>], iteration_bounds = array<i64: 1>, scalar_prefetch = 0 : i64, scratch_operands = 0 : i64, tpu.core_type = #tpu.core_type<tc>, window_params = [{transform_indices = @transform_0, window_bounds = array<i64: 384, 32>}, {pipeline_mode = #tpu.pipeline_mode<synchronous>, transform_indices = @transform_1, window_bounds = array<i64: 32, 128>}, {transform_indices = @transform_2, window_bounds = array<i64: 384, 1>}, {transform_indices = @transform_3, window_bounds = array<i64: 384, 128>}]} {
    %c0 = arith.constant 0 : index
    %c0_0 = arith.constant 0 : index
    %0 = vector.load %arg1[%c0, %c0_0] : memref<384x32xbf16, #tpu.memory_space<vmem>>, vector<384x32xbf16>
    %c0_1 = arith.constant 0 : index
    %c0_2 = arith.constant 0 : index
    %1 = vector.load %arg2[%c0_1, %c0_2] : memref<32x128xbf16, #tpu.memory_space<vmem>>, vector<32x128xbf16>
    %cst = arith.constant dense<0.000000e+00> : vector<384x128xf32>
    %2 = tpu.matmul %0, %1, %cst {dimension_numbers = #tpu.dot_dimension_numbers<[1], [0], [0], [1], [0, 0, 1, 1], [], []>} : vector<384x32xbf16>, vector<32x128xbf16>, vector<384x128xf32> -> vector<384x128xf32>
    %c0_3 = arith.constant 0 : index
    %c0_4 = arith.constant 0 : index
    %3 = vector.load %arg3[%c0_3, %c0_4] : memref<384x1xf32, #tpu.memory_space<vmem>>, vector<384x1xf32>
    %4 = vector.broadcast %3 : vector<384x1xf32> to vector<384x128xf32>
    %5 = arith.mulf %2, %4 : vector<384x128xf32>
    %6 = arith.truncf %5 : vector<384x128xf32> to vector<384x128xbf16>
    %c0_5 = arith.constant 0 : index
    %c0_6 = arith.constant 0 : index
    %7 = vector.load %arg4[%c0_5, %c0_6] : memref<384x128xbf16, #tpu.memory_space<vmem>>, vector<384x128xbf16>
    tpu.vector_store %arg4[%c0_5, %c0_6], %6 {strides = array<i32>} : memref<384x128xbf16, #tpu.memory_space<vmem>>, vector<384x128xbf16>,
    return
  }
  func.func @transform_0(%arg0: i32) -> (i32, i32) {
    %c0_i32 = arith.constant 0 : i32
    %c0_i32_0 = arith.constant 0 : i32
    return %arg0, %c0_i32 : i32, i32
  }
  func.func @transform_1(%arg0: i32) -> (i32, i32) {
    %c0_i32 = arith.constant 0 : i32
    %c0_i32_0 = arith.constant 0 : i32
    %c0_i32_1 = arith.constant 0 : i32
    return %c0_i32, %c0_i32_0 : i32, i32
  }
  func.func @transform_2(%arg0: i32) -> (i32, i32) {
    %c0_i32 = arith.constant 0 : i32
    %c0_i32_0 = arith.constant 0 : i32
    return %arg0, %c0_i32 : i32, i32
  }
  func.func @transform_3(%arg0: i32) -> (i32, i32) {
    %c0_i32 = arith.constant 0 : i32
    %c0_i32_0 = arith.constant 0 : i32
    return %arg0, %c0_i32 : i32, i32
  }
}

module attributes {stable_mosaic.version = 11 : i64} {
  func.func @_aggregate_kernel(%arg0: i32, %arg1: i32, %arg2: memref<256x384xi8, #tpu.memory_space<vmem>>, %arg3: memref<384x128xbf16, #tpu.memory_space<vmem>>, %arg4: memref<256x1xf32, #tpu.memory_space<vmem>>, %arg5: memref<1x128xf32, #tpu.memory_space<vmem>>, %arg6: memref<256x128xbf16, #tpu.memory_space<vmem>>, %arg7: memref<256x128xf32, #tpu.memory_space<vmem>>) attributes {dimension_semantics = [#tpu.dimension_semantics<parallel>, #tpu.dimension_semantics<arbitrary>], iteration_bounds = array<i64: 2, 1>, scalar_prefetch = 0 : i64, scratch_operands = 1 : i64, tpu.core_type = #tpu.core_type<tc>, window_params = [{transform_indices = @transform_0, window_bounds = array<i64: 256, 384>}, {transform_indices = @transform_1, window_bounds = array<i64: 384, 128>}, {transform_indices = @transform_2, window_bounds = array<i64: 256, 1>}, {pipeline_mode = #tpu.pipeline_mode<synchronous>, transform_indices = @transform_3, window_bounds = array<i64: 1, 128>}, {transform_indices = @transform_4, window_bounds = array<i64: 256, 128>}]} {
    %c0_i32 = arith.constant 0 : i32
    %0 = arith.cmpi eq, %arg1, %c0_i32 : i32
    %1 = arith.extui %0 : i1 to i32
    %c0_i32_0 = arith.constant 0 : i32
    %2 = arith.cmpi ne, %1, %c0_i32_0 : i32
    scf.if %2 {
      %cst_10 = arith.constant 0.000000e+00 : f32
      %13 = vector.broadcast %cst_10 : f32 to vector<256x128xf32>
      %c0_11 = arith.constant 0 : index
      %c0_12 = arith.constant 0 : index
      %14 = vector.load %arg7[%c0_11, %c0_12] : memref<256x128xf32, #tpu.memory_space<vmem>>, vector<256x128xf32>
      tpu.vector_store %arg7[%c0_11, %c0_12], %13 {strides = array<i32>} : memref<256x128xf32, #tpu.memory_space<vmem>>, vector<256x128xf32>,
    } else {
    }
    %c0 = arith.constant 0 : index
    %c0_1 = arith.constant 0 : index
    %3 = vector.load %arg2[%c0, %c0_1] : memref<256x384xi8, #tpu.memory_space<vmem>>, vector<256x384xi8>
    %4 = arith.sitofp %3 : vector<256x384xi8> to vector<256x384xbf16>
    %c0_2 = arith.constant 0 : index
    %c0_3 = arith.constant 0 : index
    %5 = vector.load %arg7[%c0_2, %c0_3] : memref<256x128xf32, #tpu.memory_space<vmem>>, vector<256x128xf32>
    %c0_4 = arith.constant 0 : index
    %c0_5 = arith.constant 0 : index
    %6 = vector.load %arg3[%c0_4, %c0_5] : memref<384x128xbf16, #tpu.memory_space<vmem>>, vector<384x128xbf16>
    %cst = arith.constant dense<0.000000e+00> : vector<256x128xf32>
    %7 = tpu.matmul %4, %6, %cst {dimension_numbers = #tpu.dot_dimension_numbers<[1], [0], [0], [1], [0, 0, 1, 1], [], []>} : vector<256x384xbf16>, vector<384x128xbf16>, vector<256x128xf32> -> vector<256x128xf32>
    %8 = arith.addf %5, %7 : vector<256x128xf32>
    %c0_6 = arith.constant 0 : index
    %c0_7 = arith.constant 0 : index
    %9 = vector.load %arg7[%c0_6, %c0_7] : memref<256x128xf32, #tpu.memory_space<vmem>>, vector<256x128xf32>
    tpu.vector_store %arg7[%c0_6, %c0_7], %8 {strides = array<i32>} : memref<256x128xf32, #tpu.memory_space<vmem>>, vector<256x128xf32>,
    %c0_i32_8 = arith.constant 0 : i32
    %10 = arith.cmpi eq, %arg1, %c0_i32_8 : i32
    %11 = arith.extui %10 : i1 to i32
    %c0_i32_9 = arith.constant 0 : i32
    %12 = arith.cmpi ne, %11, %c0_i32_9 : i32
    scf.if %12 {
      %c0_10 = arith.constant 0 : index
      %c0_11 = arith.constant 0 : index
      %13 = vector.load %arg7[%c0_10, %c0_11] : memref<256x128xf32, #tpu.memory_space<vmem>>, vector<256x128xf32>
      %c0_12 = arith.constant 0 : index
      %c0_13 = arith.constant 0 : index
      %14 = vector.load %arg4[%c0_12, %c0_13] : memref<256x1xf32, #tpu.memory_space<vmem>>, vector<256x1xf32>
      %15 = vector.broadcast %14 : vector<256x1xf32> to vector<256x128xf32>
      %16 = arith.mulf %13, %15 : vector<256x128xf32>
      %c0_14 = arith.constant 0 : index
      %c0_15 = arith.constant 0 : index
      %17 = vector.load %arg5[%c0_14, %c0_15] : memref<1x128xf32, #tpu.memory_space<vmem>>, vector<1x128xf32>
      %18 = vector.broadcast %17 : vector<1x128xf32> to vector<256x128xf32>
      %19 = arith.addf %16, %18 : vector<256x128xf32>
      %cst_16 = arith.constant 0.000000e+00 : f32
      %20 = vector.broadcast %cst_16 : f32 to vector<256x128xf32>
      %21 = arith.maximumf %19, %20 : vector<256x128xf32>
      %22 = arith.truncf %21 : vector<256x128xf32> to vector<256x128xbf16>
      %c0_17 = arith.constant 0 : index
      %c0_18 = arith.constant 0 : index
      %23 = vector.load %arg6[%c0_17, %c0_18] : memref<256x128xbf16, #tpu.memory_space<vmem>>, vector<256x128xbf16>
      tpu.vector_store %arg6[%c0_17, %c0_18], %22 {strides = array<i32>} : memref<256x128xbf16, #tpu.memory_space<vmem>>, vector<256x128xbf16>,
    } else {
    }
    return
  }
  func.func @transform_0(%arg0: i32, %arg1: i32) -> (i32, i32) {
    %c0_i32 = arith.constant 0 : i32
    return %arg0, %arg1 : i32, i32
  }
  func.func @transform_1(%arg0: i32, %arg1: i32) -> (i32, i32) {
    %c0_i32 = arith.constant 0 : i32
    %c0_i32_0 = arith.constant 0 : i32
    return %arg1, %c0_i32 : i32, i32
  }
  func.func @transform_2(%arg0: i32, %arg1: i32) -> (i32, i32) {
    %c0_i32 = arith.constant 0 : i32
    %c0_i32_0 = arith.constant 0 : i32
    return %arg0, %c0_i32 : i32, i32
  }
  func.func @transform_3(%arg0: i32, %arg1: i32) -> (i32, i32) {
    %c0_i32 = arith.constant 0 : i32
    %c0_i32_0 = arith.constant 0 : i32
    %c0_i32_1 = arith.constant 0 : i32
    return %c0_i32, %c0_i32_0 : i32, i32
  }
  func.func @transform_4(%arg0: i32, %arg1: i32) -> (i32, i32) {
    %c0_i32 = arith.constant 0 : i32
    %c0_i32_0 = arith.constant 0 : i32
    return %arg0, %c0_i32 : i32, i32
  }
}

</mosaic_0001>

<llo_original>
// kernel: gcn_layer_forward.2
$region0: #{gcn_layer_forward.2}
  #allocation0 [shape = 'u32[]', space=smem, size = 0x4, offset = 0x4, fixed_abs, tag = 'smem constant byte address 0x4 - core index']
  #allocation1 [shape = 'u32[144,128]{1,0:T(1,128)}', space=vmem, size = 0x12000, scoped, tag = 'internal scratch']
  %s0 = inlined_call_operand.vmem [shape: bf16[384,32], index: 0, kind: input, shape index: {}]
  %s1 = inlined_call_operand.vmem [shape: bf16[32,128], index: 1, kind: input, shape index: {}]
  %s2 = inlined_call_operand.vmem [shape: f32[384,1], index: 2, kind: input, shape index: {}]
  %s3 = inlined_call_operand.vmem [shape: bf16[384,128], index: 3, kind: output, shape index: {}]
  %s4 = sld [smem:[#allocation0]]
  $region22: #{gcn_layer_forward.2} parent=0
    _
  %s6 = ssub.s32 1, %s4
  %s7 = scalar_select 0, %s6, %s4
  // Predicated region
  $region2: #{gcn_layer_forward.2} parent=0 // pred_check
    _
  $region3: #{gcn_layer_forward.2} parent=0 // pred_check_branch
    %9 = sbr.rel (0) target = $region5
  $region4: #{gcn_layer_forward.2} parent=0 // pred_region
    _
  $region5: #{gcn_layer_forward.2} parent=0 // pred_fallthru
    _
  // Predicated region
  $region6: #{gcn_layer_forward.2} parent=0 // pred_check
    _
  $region7: #{gcn_layer_forward.2} parent=0 // pred_check_branch
    %11 = sbr.rel (0) target = $region9
  $region8: #{gcn_layer_forward.2} parent=0 // pred_region
    _
  $region9: #{gcn_layer_forward.2} parent=0 // pred_fallthru
    _
  // Predicated region
  $region10: #{gcn_layer_forward.2} parent=0 // pred_check
    _
  $region11: #{gcn_layer_forward.2} parent=0 // pred_check_branch
    %13 = sbr.rel (0) target = $region13
  $region12: #{gcn_layer_forward.2} parent=0 // pred_region
    _
  $region13: #{gcn_layer_forward.2} parent=0 // pred_fallthru
    _
  %v15 = vld [vmem:[%s0] sm:$0xf]
  %v16 = vld [vmem:[%s0 + $0x4] sm:$0xf]
  %v17 = vld [vmem:[%s0 + $0x8] sm:$0xf]
  %v18 = vld [vmem:[%s0 + $0xc] sm:$0xf]
  %v19 = vld [vmem:[%s0 + $0x10] sm:$0xf]
  %v20 = vld [vmem:[%s0 + $0x14] sm:$0xf]
  %v21 = vld [vmem:[%s0 + $0x18] sm:$0xf]
  %v22 = vld [vmem:[%s0 + $0x1c] sm:$0xf]
  %v23 = vld [vmem:[%s0 + $0x20] sm:$0xf]
  %v24 = vld [vmem:[%s0 + $0x24] sm:$0xf]
  %v25 = vld [vmem:[%s0 + $0x28] sm:$0xf]
  %v26 = vld [vmem:[%s0 + $0x2c] sm:$0xf]
  %v27 = vld [vmem:[%s0 + $0x30] sm:$0xf]
  %v28 = vld [vmem:[%s0 + $0x34] sm:$0xf]
  %v29 = vld [vmem:[%s0 + $0x38] sm:$0xf]
  %v30 = vld [vmem:[%s0 + $0x3c] sm:$0xf]
  %v31 = vld [vmem:[%s0 + $0x40] sm:$0xf]
  %v32 = vld [vmem:[%s0 + $0x44] sm:$0xf]
  %v33 = vld [vmem:[%s0 + $0x48] sm:$0xf]
  %v34 = vld [vmem:[%s0 + $0x4c] sm:$0xf]
  %v35 = vld [vmem:[%s0 + $0x50] sm:$0xf]
  %v36 = vld [vmem:[%s0 + $0x54] sm:$0xf]
  %v37 = vld [vmem:[%s0 + $0x58] sm:$0xf]
  %v38 = vld [vmem:[%s0 + $0x5c] sm:$0xf]
  %v39 = vld [vmem:[%s0 + $0x60] sm:$0xf]
  %v40 = vld [vmem:[%s0 + $0x64] sm:$0xf]
  %v41 = vld [vmem:[%s0 + $0x68] sm:$0xf]
  %v42 = vld [vmem:[%s0 + $0x6c] sm:$0xf]
  %v43 = vld [vmem:[%s0 + $0x70] sm:$0xf]
  %v44 = vld [vmem:[%s0 + $0x74] sm:$0xf]
  %v45 = vld [vmem:[%s0 + $0x78] sm:$0xf]
  %v46 = vld [vmem:[%s0 + $0x7c] sm:$0xf]
  %v47 = vld [vmem:[%s0 + $0x80] sm:$0xf]
  %v48 = vld [vmem:[%s0 + $0x84] sm:$0xf]
  %v49 = vld [vmem:[%s0 + $0x88] sm:$0xf]
  %v50 = vld [vmem:[%s0 + $0x8c] sm:$0xf]
  %v51 = vld [vmem:[%s0 + $0x90] sm:$0xf]
  %v52 = vld [vmem:[%s0 + $0x94] sm:$0xf]
  %v53 = vld [vmem:[%s0 + $0x98] sm:$0xf]
  %v54 = vld [vmem:[%s0 + $0x9c] sm:$0xf]
  %v55 = vld [vmem:[%s0 + $0xa0] sm:$0xf]
  %v56 = vld [vmem:[%s0 + $0xa4] sm:$0xf]
  %v57 = vld [vmem:[%s0 + $0xa8] sm:$0xf]
  %v58 = vld [vmem:[%s0 + $0xac] sm:$0xf]
  %v59 = vld [vmem:[%s0 + $0xb0] sm:$0xf]
  %v60 = vld [vmem:[%s0 + $0xb4] sm:$0xf]
  %v61 = vld [vmem:[%s0 + $0xb8] sm:$0xf]
  %v62 = vld [vmem:[%s0 + $0xbc] sm:$0xf]
  %v63 = vld [vmem:[%s1] sm:$0xf]
  %v64 = vld [vmem:[%s1 + $0x4] sm:$0xf]
  %v65 = vld [vmem:[%s1 + $0x8] sm:$0xf]
  %v66 = vld [vmem:[%s1 + $0xc] sm:$0xf]
  %v115 = vunpack.c.l.b16 %v15
  %v116 = vunpack.c.l.b16 %v16
  %v117 = vunpack.c.l.b16 %v17
  %v118 = vunpack.c.l.b16 %v18
  %v119 = vunpack.c.l.b16 %v19
  %v120 = vunpack.c.l.b16 %v20
  %v121 = vunpack.c.l.b16 %v21
  %v122 = vunpack.c.l.b16 %v22
  %v123 = vunpack.c.l.b16 %v23
  %v124 = vunpack.c.l.b16 %v24
  %v125 = vunpack.c.l.b16 %v25
  %v126 = vunpack.c.l.b16 %v26
  %v127 = vunpack.c.l.b16 %v27
  %v128 = vunpack.c.l.b16 %v28
  %v129 = vunpack.c.l.b16 %v29
  %v130 = vunpack.c.l.b16 %v30
  %v131 = vunpack.c.l.b16 %v31
  %v132 = vunpack.c.l.b16 %v32
  %v133 = vunpack.c.l.b16 %v33
  %v134 = vunpack.c.l.b16 %v34
  %v135 = vunpack.c.l.b16 %v35
  %v136 = vunpack.c.l.b16 %v36
  %v137 = vunpack.c.l.b16 %v37
  %v138 = vunpack.c.l.b16 %v38
  %v139 = vunpack.c.l.b16 %v39
  %v140 = vunpack.c.l.b16 %v40
  %v141 = vunpack.c.l.b16 %v41
  %v142 = vunpack.c.l.b16 %v42
  %v143 = vunpack.c.l.b16 %v43
  %v144 = vunpack.c.l.b16 %v44
  %v145 = vunpack.c.l.b16 %v45
  %v146 = vunpack.c.l.b16 %v46
  %v147 = vunpack.c.l.b16 %v47
  %v148 = vunpack.c.l.b16 %v48
  %v149 = vunpack.c.l.b16 %v49
  %v150 = vunpack.c.l.b16 %v50
  %v151 = vunpack.c.l.b16 %v51
  %v152 = vunpack.c.l.b16 %v52
  %v153 = vunpack.c.l.b16 %v53
  %v154 = vunpack.c.l.b16 %v54
  %v155 = vunpack.c.l.b16 %v55
  %v156 = vunpack.c.l.b16 %v56
  %v157 = vunpack.c.l.b16 %v57
  %v158 = vunpack.c.l.b16 %v58
  %v159 = vunpack.c.l.b16 %v59
  %v160 = vunpack.c.l.b16 %v60
  %v161 = vunpack.c.l.b16 %v61
  %v162 = vunpack.c.l.b16 %v62
  %v163 = vpack.c.b16 %v116, %v115
  %v164 = vpack.c.b16 %v118, %v117
  %v165 = vpack.c.b16 %v120, %v119
  %v166 = vpack.c.b16 %v122, %v121
  %v167 = vpack.c.b16 %v124, %v123
  %v168 = vpack.c.b16 %v126, %v125
  %v169 = vpack.c.b16 %v128, %v127
  %v170 = vpack.c.b16 %v130, %v129
  %v171 = vpack.c.b16 %v132, %v131
  %v172 = vpack.c.b16 %v134, %v133
  %v173 = vpack.c.b16 %v136, %v135
  %v174 = vpack.c.b16 %v138, %v137
  %v175 = vpack.c.b16 %v140, %v139
  %v176 = vpack.c.b16 %v142, %v141
  %v177 = vpack.c.b16 %v144, %v143
  %v178 = vpack.c.b16 %v146, %v145
  %v179 = vpack.c.b16 %v148, %v147
  %v180 = vpack.c.b16 %v150, %v149
  %v181 = vpack.c.b16 %v152, %v151
  %v182 = vpack.c.b16 %v154, %v153
  %v183 = vpack.c.b16 %v156, %v155
  %v184 = vpack.c.b16 %v158, %v157
  %v185 = vpack.c.b16 %v160, %v159
  %v186 = vpack.c.b16 %v162, %v161
  %v191 = vunpack.c.l.b16 %v63
  %v192 = vunpack.c.l.b16 %v64
  %v193 = vunpack.c.l.b16 %v65
  %v194 = vunpack.c.l.b16 %v66
  %v195 = vpack.c.b16 %v192, %v191
  %v196 = vpack.c.b16 %v194, %v193
  %vm199 = vcmask 261120
  %v201 = vsel %vm199, %v163, 0
  %v204 = vsel %vm199, %v164, 0
  %v207 = vsel %vm199, %v165, 0
  %v210 = vsel %vm199, %v166, 0
  %v213 = vsel %vm199, %v167, 0
  %v216 = vsel %vm199, %v168, 0
  %v219 = vsel %vm199, %v169, 0
  %v222 = vsel %vm199, %v170, 0
  %v225 = vsel %vm199, %v171, 0
  %v228 = vsel %vm199, %v172, 0
  %v231 = vsel %vm199, %v173, 0
  %v234 = vsel %vm199, %v174, 0
  %v237 = vsel %vm199, %v175, 0
  %v240 = vsel %vm199, %v176, 0
  %v243 = vsel %vm199, %v177, 0
  %v246 = vsel %vm199, %v178, 0
  %v249 = vsel %vm199, %v179, 0
  %v252 = vsel %vm199, %v180, 0
  %v255 = vsel %vm199, %v181, 0
  %v258 = vsel %vm199, %v182, 0
  %v261 = vsel %vm199, %v183, 0
  %v264 = vsel %vm199, %v184, 0
  %v267 = vsel %vm199, %v185, 0
  %v270 = vsel %vm199, %v186, 0
  %272 = vmatprep.subr.bf16.mxu0 0
  %273 = vmatpush1.bf16.msra.mxu0 %v195
  %274 = vmatprep.subr.bf16.mxu0 0
  %275 = vmatpush1.bf16.msra.mxu0 %v196
  %276 = vmatprep.subr.bf16.mxu0 0
  %277 = vmatpush1.bf16.msra.mxu0 0
  %278 = vmatprep.subr.bf16.mxu0 0
  %279 = vmatpush1.bf16.msra.mxu0 0
  %280 = vmatprep.subr.bf16.mxu0 0
  %281 = vmatpush1.bf16.msra.mxu0 0
  %282 = vmatprep.subr.bf16.mxu0 0
  %283 = vmatpush1.bf16.msra.mxu0 0
  %284 = vmatprep.subr.bf16.mxu0 0
  %285 = vmatpush1.bf16.msra.mxu0 0
  %286 = vmatprep.subr.bf16.mxu0 0
  %287 = vmatpush1.bf16.msra.mxu0 0
  %288 = vmatprep.subr.bf16.mxu0 0
  %289 = vmatpush1.bf16.msra.mxu0 0
  %290 = vmatprep.subr.bf16.mxu0 0
  %291 = vmatpush1.bf16.msra.mxu0 0
  %292 = vmatprep.subr.bf16.mxu0 0
  %293 = vmatpush1.bf16.msra.mxu0 0
  %294 = vmatprep.subr.bf16.mxu0 0
  %295 = vmatpush1.bf16.msra.mxu0 0
  %296 = vmatprep.subr.bf16.mxu0 0
  %297 = vmatpush1.bf16.msra.mxu0 0
  %298 = vmatprep.subr.bf16.mxu0 0
  %299 = vmatpush1.bf16.msra.mxu0 0
  %300 = vmatprep.subr.bf16.mxu0 0
  %301 = vmatpush1.bf16.msra.mxu0 0
  %302 = vmatprep.subr.bf16.mxu0 0
  %303 = vmatpush1.bf16.msra.mxu0 0
  %304 = vmatprep.mubr.bf16.mxu0 0
  %305 = vmatmul.mubr.bf16.gmra.mrb[0].mxu0 %v201
  %v306 = vpop.f32.mrb[0].mxu0
  %v307 = vadd.f32 0.0, %v306
  %v308 = vpop.f32.mrb[0].mxu0
  %v309 = vpop.f32.mrb[0].mxu0
  %v310 = vadd.f32 0.0, %v309
  %v311 = vpop.f32.mrb[0].mxu0
  %312 = vmatprep.mubr.bf16.mxu0 0
  %313 = vmatmul.mubr.bf16.gmra.mrb[0].mxu0 %v204
  %v314 = vpop.f32.mrb[0].mxu0
  %v315 = vadd.f32 0.0, %v314
  %v316 = vpop.f32.mrb[0].mxu0
  %v317 = vpop.f32.mrb[0].mxu0
  %v318 = vadd.f32 0.0, %v317
  %v319 = vpop.f32.mrb[0].mxu0
  %320 = vmatprep.mubr.bf16.mxu0 0
  %321 = vmatmul.mubr.bf16.gmra.mrb[0].mxu0 %v207
  %v322 = vpop.f32.mrb[0].mxu0
  %v323 = vadd.f32 0.0, %v322
  %v324 = vpop.f32.mrb[0].mxu0
  %v325 = vpop.f32.mrb[0].mxu0
  %v326 = vadd.f32 0.0, %v325
  %v327 = vpop.f32.mrb[0].mxu0
  %328 = vmatprep.mubr.bf16.mxu0 0
  %329 = vmatmul.mubr.bf16.gmra.mrb[0].mxu0 %v210
  %v330 = vpop.f32.mrb[0].mxu0
  %v331 = vadd.f32 0.0, %v330
  %v332 = vpop.f32.mrb[0].mxu0
  %v333 = vpop.f32.mrb[0].mxu0
  %v334 = vadd.f32 0.0, %v333
  %v335 = vpop.f32.mrb[0].mxu0
  %336 = vmatprep.mubr.bf16.mxu0 0
  %337 = vmatmul.mubr.bf16.gmra.mrb[0].mxu0 %v213
  %v338 = vpop.f32.mrb[0].mxu0
  %v339 = vadd.f32 0.0, %v338
  %v340 = vpop.f32.mrb[0].mxu0
  %v341 = vpop.f32.mrb[0].mxu0
  %v342 = vadd.f32 0.0, %v341
  %v343 = vpop.f32.mrb[0].mxu0
  %344 = vmatprep.mubr.bf16.mxu0 0
  %345 = vmatmul.mubr.bf16.gmra.mrb[0].mxu0 %v216
  %v346 = vpop.f32.mrb[0].mxu0
  %v347 = vadd.f32 0.0, %v346
  %v348 = vpop.f32.mrb[0].mxu0
  %v349 = vpop.f32.mrb[0].mxu0
  %v350 = vadd.f32 0.0, %v349
  %v351 = vpop.f32.mrb[0].mxu0
  %352 = vmatprep.mubr.bf16.mxu0 0
  %353 = vmatmul.mubr.bf16.gmra.mrb[0].mxu0 %v219
  %v354 = vpop.f32.mrb[0].mxu0
  %v355 = vadd.f32 0.0, %v354
  %v356 = vpop.f32.mrb[0].mxu0
  %v357 = vpop.f32.mrb[0].mxu0
  %v358 = vadd.f32 0.0, %v357
  %v359 = vpop.f32.mrb[0].mxu0
  %360 = vmatprep.mubr.bf16.mxu0 0
  %361 = vmatmul.mubr.bf16.gmra.mrb[0].mxu0 %v222
  %v362 = vpop.f32.mrb[0].mxu0
  %v363 = vadd.f32 0.0, %v362
  %v364 = vpop.f32.mrb[0].mxu0
  %v365 = vpop.f32.mrb[0].mxu0
  %v366 = vadd.f32 0.0, %v365
  %v367 = vpop.f32.mrb[0].mxu0
  %368 = vmatprep.mubr.bf16.mxu0 0
  %369 = vmatmul.mubr.bf16.gmra.mrb[0].mxu0 %v225
  %v370 = vpop.f32.mrb[0].mxu0
  %v371 = vadd.f32 0.0, %v370
  %v372 = vpop.f32.mrb[0].mxu0
  %v373 = vpop.f32.mrb[0].mxu0
  %v374 = vadd.f32 0.0, %v373
  %v375 = vpop.f32.mrb[0].mxu0
  %376 = vmatprep.mubr.bf16.mxu0 0
  %377 = vmatmul.mubr.bf16.gmra.mrb[0].mxu0 %v228
  %v378 = vpop.f32.mrb[0].mxu0
  %v379 = vadd.f32 0.0, %v378
  %v380 = vpop.f32.mrb[0].mxu0
  %v381 = vpop.f32.mrb[0].mxu0
  %v382 = vadd.f32 0.0, %v381
  %v383 = vpop.f32.mrb[0].mxu0
  %384 = vmatprep.mubr.bf16.mxu0 0
  %385 = vmatmul.mubr.bf16.gmra.mrb[0].mxu0 %v231
  %v386 = vpop.f32.mrb[0].mxu0
  %v387 = vadd.f32 0.0, %v386
  %v388 = vpop.f32.mrb[0].mxu0
  %v389 = vpop.f32.mrb[0].mxu0
  %v390 = vadd.f32 0.0, %v389
  %v391 = vpop.f32.mrb[0].mxu0
  %392 = vmatprep.mubr.bf16.mxu0 0
  %393 = vmatmul.mubr.bf16.gmra.mrb[0].mxu0 %v234
  %v394 = vpop.f32.mrb[0].mxu0
  %v395 = vadd.f32 0.0, %v394
  %v396 = vpop.f32.mrb[0].mxu0
  %v397 = vpop.f32.mrb[0].mxu0
  %v398 = vadd.f32 0.0, %v397
  %v399 = vpop.f32.mrb[0].mxu0
  %400 = vmatprep.mubr.bf16.mxu0 0
  %401 = vmatmul.mubr.bf16.gmra.mrb[0].mxu0 %v237
  %v402 = vpop.f32.mrb[0].mxu0
  %v403 = vadd.f32 0.0, %v402
  %v404 = vpop.f32.mrb[0].mxu0
  %v405 = vpop.f32.mrb[0].mxu0
  %v406 = vadd.f32 0.0, %v405
  %v407 = vpop.f32.mrb[0].mxu0
  %408 = vmatprep.mubr.bf16.mxu0 0
  %409 = vmatmul.mubr.bf16.gmra.mrb[0].mxu0 %v240
  %v410 = vpop.f32.mrb[0].mxu0
  %v411 = vadd.f32 0.0, %v410
  %v412 = vpop.f32.mrb[0].mxu0
  %v413 = vpop.f32.mrb[0].mxu0
  %v414 = vadd.f32 0.0, %v413
  %v415 = vpop.f32.mrb[0].mxu0
  %416 = vmatprep.mubr.bf16.mxu0 0
  %417 = vmatmul.mubr.bf16.gmra.mrb[0].mxu0 %v243
  %v418 = vpop.f32.mrb[0].mxu0
  %v419 = vadd.f32 0.0, %v418
  %v420 = vpop.f32.mrb[0].mxu0
  %v421 = vpop.f32.mrb[0].mxu0
  %v422 = vadd.f32 0.0, %v421
  %v423 = vpop.f32.mrb[0].mxu0
  %424 = vmatprep.mubr.bf16.mxu0 0
  %425 = vmatmul.mubr.bf16.gmra.mrb[0].mxu0 %v246
  %v426 = vpop.f32.mrb[0].mxu0
  %v427 = vadd.f32 0.0, %v426
  %v428 = vpop.f32.mrb[0].mxu0
  %v429 = vpop.f32.mrb[0].mxu0
  %v430 = vadd.f32 0.0, %v429
  %v431 = vpop.f32.mrb[0].mxu0
  %432 = vmatprep.mubr.bf16.mxu0 0
  %433 = vmatmul.mubr.bf16.gmra.mrb[0].mxu0 %v249
  %v434 = vpop.f32.mrb[0].mxu0
  %v435 = vadd.f32 0.0, %v434
  %v436 = vpop.f32.mrb[0].mxu0
  %v437 = vpop.f32.mrb[0].mxu0
  %v438 = vadd.f32 0.0, %v437
  %v439 = vpop.f32.mrb[0].mxu0
  %440 = vmatprep.mubr.bf16.mxu0 0
  %441 = vmatmul.mubr.bf16.gmra.mrb[0].mxu0 %v252
  %v442 = vpop.f32.mrb[0].mxu0
  %v443 = vadd.f32 0.0, %v442
  %v444 = vpop.f32.mrb[0].mxu0
  %v445 = vpop.f32.mrb[0].mxu0
  %v446 = vadd.f32 0.0, %v445
  %v447 = vpop.f32.mrb[0].mxu0
  %448 = vmatprep.mubr.bf16.mxu0 0
  %449 = vmatmul.mubr.bf16.gmra.mrb[0].mxu0 %v255
  %v450 = vpop.f32.mrb[0].mxu0
  %v451 = vadd.f32 0.0, %v450
  %v452 = vpop.f32.mrb[0].mxu0
  %v453 = vpop.f32.mrb[0].mxu0
  %v454 = vadd.f32 0.0, %v453
  %v455 = vpop.f32.mrb[0].mxu0
  %456 = vmatprep.mubr.bf16.mxu0 0
  %457 = vmatmul.mubr.bf16.gmra.mrb[0].mxu0 %v258
  %v458 = vpop.f32.mrb[0].mxu0
  %v459 = vadd.f32 0.0, %v458
  %v460 = vpop.f32.mrb[0].mxu0
  %v461 = vpop.f32.mrb[0].mxu0
  %v462 = vadd.f32 0.0, %v461
  %v463 = vpop.f32.mrb[0].mxu0
  %464 = vmatprep.mubr.bf16.mxu0 0
  %465 = vmatmul.mubr.bf16.gmra.mrb[0].mxu0 %v261
  %v466 = vpop.f32.mrb[0].mxu0
  %v467 = vadd.f32 0.0, %v466
  %v468 = vpop.f32.mrb[0].mxu0
  %v469 = vpop.f32.mrb[0].mxu0
  %v470 = vadd.f32 0.0, %v469
  %v471 = vpop.f32.mrb[0].mxu0
  %472 = vmatprep.mubr.bf16.mxu0 0
  %473 = vmatmul.mubr.bf16.gmra.mrb[0].mxu0 %v264
  %v474 = vpop.f32.mrb[0].mxu0
  %v475 = vadd.f32 0.0, %v474
  %v476 = vpop.f32.mrb[0].mxu0
  %v477 = vpop.f32.mrb[0].mxu0
  %v478 = vadd.f32 0.0, %v477
  %v479 = vpop.f32.mrb[0].mxu0
  %480 = vmatprep.mubr.bf16.mxu0 0
  %481 = vmatmul.mubr.bf16.gmra.mrb[0].mxu0 %v267
  %v482 = vpop.f32.mrb[0].mxu0
  %v483 = vadd.f32 0.0, %v482
  %v484 = vpop.f32.mrb[0].mxu0
  %v485 = vpop.f32.mrb[0].mxu0
  %v486 = vadd.f32 0.0, %v485
  %v487 = vpop.f32.mrb[0].mxu0
  %488 = vmatprep.mubr.bf16.mxu0 0
  %489 = vmatmul.mubr.bf16.gmra.mrb[0].mxu0 %v270
  %v490 = vpop.f32.mrb[0].mxu0
  %v491 = vadd.f32 0.0, %v490
  %v492 = vpop.f32.mrb[0].mxu0
  %v493 = vpop.f32.mrb[0].mxu0
  %v494 = vadd.f32 0.0, %v493
  %v495 = vpop.f32.mrb[0].mxu0
  %496 = vdwg.mxu0
  %v497 = vld [vmem:[%s2] sm:$0xff]
  %v498 = vld [vmem:[%s2 + $0x8] sm:$0xff]
  %v499 = vld [vmem:[%s2 + $0x10] sm:$0xff]
  %v500 = vld [vmem:[%s2 + $0x18] sm:$0xff]
  %v501 = vld [vmem:[%s2 + $0x20] sm:$0xff]
  %v502 = vld [vmem:[%s2 + $0x28] sm:$0xff]
  %v503 = vld [vmem:[%s2 + $0x30] sm:$0xff]
  %v504 = vld [vmem:[%s2 + $0x38] sm:$0xff]
  %v505 = vld [vmem:[%s2 + $0x40] sm:$0xff]
  %v506 = vld [vmem:[%s2 + $0x48] sm:$0xff]
  %v507 = vld [vmem:[%s2 + $0x50] sm:$0xff]
  %v508 = vld [vmem:[%s2 + $0x58] sm:$0xff]
  %v509 = vld [vmem:[%s2 + $0x60] sm:$0xff]
  %v510 = vld [vmem:[%s2 + $0x68] sm:$0xff]
  %v511 = vld [vmem:[%s2 + $0x70] sm:$0xff]
  %v512 = vld [vmem:[%s2 + $0x78] sm:$0xff]
  %v513 = vld [vmem:[%s2 + $0x80] sm:$0xff]
  %v514 = vld [vmem:[%s2 + $0x88] sm:$0xff]
  %v515 = vld [vmem:[%s2 + $0x90] sm:$0xff]
  %v516 = vld [vmem:[%s2 + $0x98] sm:$0xff]
  %v517 = vld [vmem:[%s2 + $0xa0] sm:$0xff]
  %v518 = vld [vmem:[%s2 + $0xa8] sm:$0xff]
  %v519 = vld [vmem:[%s2 + $0xb0] sm:$0xff]
  %v520 = vld [vmem:[%s2 + $0xb8] sm:$0xff]
  %v521 = vld [vmem:[%s2 + $0xc0] sm:$0xff]
  %v522 = vld [vmem:[%s2 + $0xc8] sm:$0xff]
  %v523 = vld [vmem:[%s2 + $0xd0] sm:$0xff]
  %v524 = vld [vmem:[%s2 + $0xd8] sm:$0xff]
  %v525 = vld [vmem:[%s2 + $0xe0] sm:$0xff]
  %v526 = vld [vmem:[%s2 + $0xe8] sm:$0xff]
  %v527 = vld [vmem:[%s2 + $0xf0] sm:$0xff]
  %v528 = vld [vmem:[%s2 + $0xf8] sm:$0xff]
  %v529 = vld [vmem:[%s2 + $0x100] sm:$0xff]
  %v530 = vld [vmem:[%s2 + $0x108] sm:$0xff]
  %v531 = vld [vmem:[%s2 + $0x110] sm:$0xff]
  %v532 = vld [vmem:[%s2 + $0x118] sm:$0xff]
  %v533 = vld [vmem:[%s2 + $0x120] sm:$0xff]
  %v534 = vld [vmem:[%s2 + $0x128] sm:$0xff]
  %v535 = vld [vmem:[%s2 + $0x130] sm:$0xff]
  %v536 = vld [vmem:[%s2 + $0x138] sm:$0xff]
  %v537 = vld [vmem:[%s2 + $0x140] sm:$0xff]
  %v538 = vld [vmem:[%s2 + $0x148] sm:$0xff]
  %v539 = vld [vmem:[%s2 + $0x150] sm:$0xff]
  %v540 = vld [vmem:[%s2 + $0x158] sm:$0xff]
  %v541 = vld [vmem:[%s2 + $0x160] sm:$0xff]
  %v542 = vld [vmem:[%s2 + $0x168] sm:$0xff]
  %v543 = vld [vmem:[%s2 + $0x170] sm:$0xff]
  %v544 = vld [vmem:[%s2 + $0x178] sm:$0xff]
  %546 = vset.pattern.permute.xlu0 0
  %547 = vperm.xlu0 %546, %v497
  %v548 = vpop.permute.xlu0 %547
  %551 = vset.pattern.permute.xlu0 0
  %552 = vperm.xlu0 %551, %v498
  %v553 = vpop.permute.xlu0 %552
  %556 = vset.pattern.permute.xlu0 0
  %557 = vperm.xlu0 %556, %v499
  %v558 = vpop.permute.xlu0 %557
  %561 = vset.pattern.permute.xlu0 0
  %562 = vperm.xlu0 %561, %v500
  %v563 = vpop.permute.xlu0 %562
  %566 = vset.pattern.permute.xlu0 0
  %567 = vperm.xlu0 %566, %v501
  %v568 = vpop.permute.xlu0 %567
  %571 = vset.pattern.permute.xlu0 0
  %572 = vperm.xlu0 %571, %v502
  %v573 = vpop.permute.xlu0 %572
  %576 = vset.pattern.permute.xlu0 0
  %577 = vperm.xlu0 %576, %v503
  %v578 = vpop.permute.xlu0 %577
  %581 = vset.pattern.permute.xlu0 0
  %582 = vperm.xlu0 %581, %v504
  %v583 = vpop.permute.xlu0 %582
  %586 = vset.pattern.permute.xlu0 0
  %587 = vperm.xlu0 %586, %v505
  %v588 = vpop.permute.xlu0 %587
  %591 = vset.pattern.permute.xlu0 0
  %592 = vperm.xlu0 %591, %v506
  %v593 = vpop.permute.xlu0 %592
  %596 = vset.pattern.permute.xlu0 0
  %597 = vperm.xlu0 %596, %v507
  %v598 = vpop.permute.xlu0 %597
  %601 = vset.pattern.permute.xlu0 0
  %602 = vperm.xlu0 %601, %v508
  %v603 = vpop.permute.xlu0 %602
  %606 = vset.pattern.permute.xlu0 0
  %607 = vperm.xlu0 %606, %v509
  %v608 = vpop.permute.xlu0 %607
  %611 = vset.pattern.permute.xlu0 0
  %612 = vperm.xlu0 %611, %v510
  %v613 = vpop.permute.xlu0 %612
  %616 = vset.pattern.permute.xlu0 0
  %617 = vperm.xlu0 %616, %v511
  %v618 = vpop.permute.xlu0 %617
  %621 = vset.pattern.permute.xlu0 0
  %622 = vperm.xlu0 %621, %v512
  %v623 = vpop.permute.xlu0 %622
  %626 = vset.pattern.permute.xlu0 0
  %627 = vperm.xlu0 %626, %v513
  %v628 = vpop.permute.xlu0 %627
  %631 = vset.pattern.permute.xlu0 0
  %632 = vperm.xlu0 %631, %v514
  %v633 = vpop.permute.xlu0 %632
  %636 = vset.pattern.permute.xlu0 0
  %637 = vperm.xlu0 %636, %v515
  %v638 = vpop.permute.xlu0 %637
  %641 = vset.pattern.permute.xlu0 0
  %642 = vperm.xlu0 %641, %v516
  %v643 = vpop.permute.xlu0 %642
  %646 = vset.pattern.permute.xlu0 0
  %647 = vperm.xlu0 %646, %v517
  %v648 = vpop.permute.xlu0 %647
  %651 = vset.pattern.permute.xlu0 0
  %652 = vperm.xlu0 %651, %v518
  %v653 = vpop.permute.xlu0 %652
  %656 = vset.pattern.permute.xlu0 0
  %657 = vperm.xlu0 %656, %v519
  %v658 = vpop.permute.xlu0 %657
  %661 = vset.pattern.permute.xlu0 0
  %662 = vperm.xlu0 %661, %v520
  %v663 = vpop.permute.xlu0 %662
  %666 = vset.pattern.permute.xlu0 0
  %667 = vperm.xlu0 %666, %v521
  %v668 = vpop.permute.xlu0 %667
  %671 = vset.pattern.permute.xlu0 0
  %672 = vperm.xlu0 %671, %v522
  %v673 = vpop.permute.xlu0 %672
  %676 = vset.pattern.permute.xlu0 0
  %677 = vperm.xlu0 %676, %v523
  %v678 = vpop.permute.xlu0 %677
  %681 = vset.pattern.permute.xlu0 0
  %682 = vperm.xlu0 %681, %v524
  %v683 = vpop.permute.xlu0 %682
  %686 = vset.pattern.permute.xlu0 0
  %687 = vperm.xlu0 %686, %v525
  %v688 = vpop.permute.xlu0 %687
  %691 = vset.pattern.permute.xlu0 0
  %692 = vperm.xlu0 %691, %v526
  %v693 = vpop.permute.xlu0 %692
  %696 = vset.pattern.permute.xlu0 0
  %697 = vperm.xlu0 %696, %v527
  %v698 = vpop.permute.xlu0 %697
  %701 = vset.pattern.permute.xlu0 0
  %702 = vperm.xlu0 %701, %v528
  %v703 = vpop.permute.xlu0 %702
  %706 = vset.pattern.permute.xlu0 0
  %707 = vperm.xlu0 %706, %v529
  %v708 = vpop.permute.xlu0 %707
  %711 = vset.pattern.permute.xlu0 0
  %712 = vperm.xlu0 %711, %v530
  %v713 = vpop.permute.xlu0 %712
  %716 = vset.pattern.permute.xlu0 0
  %717 = vperm.xlu0 %716, %v531
  %v718 = vpop.permute.xlu0 %717
  %721 = vset.pattern.permute.xlu0 0
  %722 = vperm.xlu0 %721, %v532
  %v723 = vpop.permute.xlu0 %722
  %726 = vset.pattern.permute.xlu0 0
  %727 = vperm.xlu0 %726, %v533
  %v728 = vpop.permute.xlu0 %727
  %731 = vset.pattern.permute.xlu0 0
  %732 = vperm.xlu0 %731, %v534
  %v733 = vpop.permute.xlu0 %732
  %736 = vset.pattern.permute.xlu0 0
  %737 = vperm.xlu0 %736, %v535
  %v738 = vpop.permute.xlu0 %737
  %741 = vset.pattern.permute.xlu0 0
  %742 = vperm.xlu0 %741, %v536
  %v743 = vpop.permute.xlu0 %742
  %746 = vset.pattern.permute.xlu0 0
  %747 = vperm.xlu0 %746, %v537
  %v748 = vpop.permute.xlu0 %747
  %751 = vset.pattern.permute.xlu0 0
  %752 = vperm.xlu0 %751, %v538
  %v753 = vpop.permute.xlu0 %752
  %756 = vset.pattern.permute.xlu0 0
  %757 = vperm.xlu0 %756, %v539
  %v758 = vpop.permute.xlu0 %757
  %761 = vset.pattern.permute.xlu0 0
  %762 = vperm.xlu0 %761, %v540
  %v763 = vpop.permute.xlu0 %762
  %766 = vset.pattern.permute.xlu0 0
  %767 = vperm.xlu0 %766, %v541
  %v768 = vpop.permute.xlu0 %767
  %771 = vset.pattern.permute.xlu0 0
  %772 = vperm.xlu0 %771, %v542
  %v773 = vpop.permute.xlu0 %772
  %776 = vset.pattern.permute.xlu0 0
  %777 = vperm.xlu0 %776, %v543
  %v778 = vpop.permute.xlu0 %777
  %781 = vset.pattern.permute.xlu0 0
  %782 = vperm.xlu0 %781, %v544
  %v783 = vpop.permute.xlu0 %782
  %v785 = vmul.f32 %v307, %v548
  %v786 = vmul.f32 %v310, %v553
  %v787 = vmul.f32 %v315, %v558
  %v788 = vmul.f32 %v318, %v563
  %v789 = vmul.f32 %v323, %v568
  %v790 = vmul.f32 %v326, %v573
  %v791 = vmul.f32 %v331, %v578
  %v792 = vmul.f32 %v334, %v583
  %v793 = vmul.f32 %v339, %v588
  %v794 = vmul.f32 %v342, %v593
  %v795 = vmul.f32 %v347, %v598
  %v796 = vmul.f32 %v350, %v603
  %v797 = vmul.f32 %v355, %v608
  %v798 = vmul.f32 %v358, %v613
  %v799 = vmul.f32 %v363, %v618
  %v800 = vmul.f32 %v366, %v623
  %v801 = vmul.f32 %v371, %v628
  %v802 = vmul.f32 %v374, %v633
  %v803 = vmul.f32 %v379, %v638
  %v804 = vmul.f32 %v382, %v643
  %v805 = vmul.f32 %v387, %v648
  %v806 = vmul.f32 %v390, %v653
  %v807 = vmul.f32 %v395, %v658
  %v808 = vmul.f32 %v398, %v663
  %v809 = vmul.f32 %v403, %v668
  %v810 = vmul.f32 %v406, %v673
  %v811 = vmul.f32 %v411, %v678
  %v812 = vmul.f32 %v414, %v683
  %v813 = vmul.f32 %v419, %v688
  %v814 = vmul.f32 %v422, %v693
  %v815 = vmul.f32 %v427, %v698
  %v816 = vmul.f32 %v430, %v703
  %v817 = vmul.f32 %v435, %v708
  %v818 = vmul.f32 %v438, %v713
  %v819 = vmul.f32 %v443, %v718
  %v820 = vmul.f32 %v446, %v723
  %v821 = vmul.f32 %v451, %v728
  %v822 = vmul.f32 %v454, %v733
  %v823 = vmul.f32 %v459, %v738
  %v824 = vmul.f32 %v462, %v743
  %v825 = vmul.f32 %v467, %v748
  %v826 = vmul.f32 %v470, %v753
  %v827 = vmul.f32 %v475, %v758
  %v828 = vmul.f32 %v478, %v763
  %v829 = vmul.f32 %v483, %v768
  %v830 = vmul.f32 %v486, %v773
  %v831 = vmul.f32 %v491, %v778
  %v832 = vmul.f32 %v494, %v783
  %v833 = vpack.c.bf16 %v786, %v785
  %v834 = vpack.c.bf16 %v788, %v787
  %v835 = vpack.c.bf16 %v790, %v789
  %v836 = vpack.c.bf16 %v792, %v791
  %v837 = vpack.c.bf16 %v794, %v793
  %v838 = vpack.c.bf16 %v796, %v795
  %v839 = vpack.c.bf16 %v798, %v797
  %v840 = vpack.c.bf16 %v800, %v799
  %v841 = vpack.c.bf16 %v802, %v801
  %v842 = vpack.c.bf16 %v804, %v803
  %v843 = vpack.c.bf16 %v806, %v805
  %v844 = vpack.c.bf16 %v808, %v807
  %v845 = vpack.c.bf16 %v810, %v809
  %v846 = vpack.c.bf16 %v812, %v811
  %v847 = vpack.c.bf16 %v814, %v813
  %v848 = vpack.c.bf16 %v816, %v815
  %v849 = vpack.c.bf16 %v818, %v817
  %v850 = vpack.c.bf16 %v820, %v819
  %v851 = vpack.c.bf16 %v822, %v821
  %v852 = vpack.c.bf16 %v824, %v823
  %v853 = vpack.c.bf16 %v826, %v825
  %v854 = vpack.c.bf16 %v828, %v827
  %v855 = vpack.c.bf16 %v830, %v829
  %v856 = vpack.c.bf16 %v832, %v831
  %v881 = vunpack.c.l.b16 %v833
  %v882 = vunpack.c.h.b16 %v833
  %v883 = vunpack.c.l.b16 %v834
  %v884 = vunpack.c.h.b16 %v834
  %v885 = vunpack.c.l.b16 %v835
  %v886 = vunpack.c.h.b16 %v835
  %v887 = vunpack.c.l.b16 %v836
  %v888 = vunpack.c.h.b16 %v836
  %v889 = vunpack.c.l.b16 %v837
  %v890 = vunpack.c.h.b16 %v837
  %v891 = vunpack.c.l.b16 %v838
  %v892 = vunpack.c.h.b16 %v838
  %v893 = vunpack.c.l.b16 %v839
  %v894 = vunpack.c.h.b16 %v839
  %v895 = vunpack.c.l.b16 %v840
  %v896 = vunpack.c.h.b16 %v840
  %v897 = vunpack.c.l.b16 %v841
  %v898 = vunpack.c.h.b16 %v841
  %v899 = vunpack.c.l.b16 %v842
  %v900 = vunpack.c.h.b16 %v842
  %v901 = vunpack.c.l.b16 %v843
  %v902 = vunpack.c.h.b16 %v843
  %v903 = vunpack.c.l.b16 %v844
  %v904 = vunpack.c.h.b16 %v844
  %v905 = vunpack.c.l.b16 %v845
  %v906 = vunpack.c.h.b16 %v845
  %v907 = vunpack.c.l.b16 %v846
  %v908 = vunpack.c.h.b16 %v846
  %v909 = vunpack.c.l.b16 %v847
  %v910 = vunpack.c.h.b16 %v847
  %v911 = vunpack.c.l.b16 %v848
  %v912 = vunpack.c.h.b16 %v848
  %v913 = vunpack.c.l.b16 %v849
  %v914 = vunpack.c.h.b16 %v849
  %v915 = vunpack.c.l.b16 %v850
  %v916 = vunpack.c.h.b16 %v850
  %v917 = vunpack.c.l.b16 %v851
  %v918 = vunpack.c.h.b16 %v851
  %v919 = vunpack.c.l.b16 %v852
  %v920 = vunpack.c.h.b16 %v852
  %v921 = vunpack.c.l.b16 %v853
  %v922 = vunpack.c.h.b16 %v853
  %v923 = vunpack.c.l.b16 %v854
  %v924 = vunpack.c.h.b16 %v854
  %v925 = vunpack.c.l.b16 %v855
  %v926 = vunpack.c.h.b16 %v855
  %v927 = vunpack.c.l.b16 %v856
  %v928 = vunpack.c.h.b16 %v856
  %v929 = vpack.c.b16 %v881, %v881
  %v930 = vpack.c.b16 %v882, %v882
  %v931 = vpack.c.b16 %v883, %v883
  %v932 = vpack.c.b16 %v884, %v884
  %v933 = vpack.c.b16 %v885, %v885
  %v934 = vpack.c.b16 %v886, %v886
  %v935 = vpack.c.b16 %v887, %v887
  %v936 = vpack.c.b16 %v888, %v888
  %v937 = vpack.c.b16 %v889, %v889
  %v938 = vpack.c.b16 %v890, %v890
  %v939 = vpack.c.b16 %v891, %v891
  %v940 = vpack.c.b16 %v892, %v892
  %v941 = vpack.c.b16 %v893, %v893
  %v942 = vpack.c.b16 %v894, %v894
  %v943 = vpack.c.b16 %v895, %v895
  %v944 = vpack.c.b16 %v896, %v896
  %v945 = vpack.c.b16 %v897, %v897
  %v946 = vpack.c.b16 %v898, %v898
  %v947 = vpack.c.b16 %v899, %v899
  %v948 = vpack.c.b16 %v900, %v900
  %v949 = vpack.c.b16 %v901, %v901
  %v950 = vpack.c.b16 %v902, %v902
  %v951 = vpack.c.b16 %v903, %v903
  %v952 = vpack.c.b16 %v904, %v904
  %v953 = vpack.c.b16 %v905, %v905
  %v954 = vpack.c.b16 %v906, %v906
  %v955 = vpack.c.b16 %v907, %v907
  %v956 = vpack.c.b16 %v908, %v908
  %v957 = vpack.c.b16 %v909, %v909
  %v958 = vpack.c.b16 %v910, %v910
  %v959 = vpack.c.b16 %v911, %v911
  %v960 = vpack.c.b16 %v912, %v912
  %v961 = vpack.c.b16 %v913, %v913
  %v962 = vpack.c.b16 %v914, %v914
  %v963 = vpack.c.b16 %v915, %v915
  %v964 = vpack.c.b16 %v916, %v916
  %v965 = vpack.c.b16 %v917, %v917
  %v966 = vpack.c.b16 %v918, %v918
  %v967 = vpack.c.b16 %v919, %v919
  %v968 = vpack.c.b16 %v920, %v920
  %v969 = vpack.c.b16 %v921, %v921
  %v970 = vpack.c.b16 %v922, %v922
  %v971 = vpack.c.b16 %v923, %v923
  %v972 = vpack.c.b16 %v924, %v924
  %v973 = vpack.c.b16 %v925, %v925
  %v974 = vpack.c.b16 %v926, %v926
  %v975 = vpack.c.b16 %v927, %v927
  %v976 = vpack.c.b16 %v928, %v928
  %1025 = vst [vmem:[%s3] sm:$0xf] %v929
  %1026 = vst [vmem:[%s3 + $0x4] sm:$0xf] %v930
  %1027 = vst [vmem:[%s3 + $0x8] sm:$0xf] %v931
  %1028 = vst [vmem:[%s3 + $0xc] sm:$0xf] %v932
  %1029 = vst [vmem:[%s3 + $0x10] sm:$0xf] %v933
  %1030 = vst [vmem:[%s3 + $0x14] sm:$0xf] %v934
  %1031 = vst [vmem:[%s3 + $0x18] sm:$0xf] %v935
  %1032 = vst [vmem:[%s3 + $0x1c] sm:$0xf] %v936
  %1033 = vst [vmem:[%s3 + $0x20] sm:$0xf] %v937
  %1034 = vst [vmem:[%s3 + $0x24] sm:$0xf] %v938
  %1035 = vst [vmem:[%s3 + $0x28] sm:$0xf] %v939
  %1036 = vst [vmem:[%s3 + $0x2c] sm:$0xf] %v940
  %1037 = vst [vmem:[%s3 + $0x30] sm:$0xf] %v941
  %1038 = vst [vmem:[%s3 + $0x34] sm:$0xf] %v942
  %1039 = vst [vmem:[%s3 + $0x38] sm:$0xf] %v943
  %1040 = vst [vmem:[%s3 + $0x3c] sm:$0xf] %v944
  %1041 = vst [vmem:[%s3 + $0x40] sm:$0xf] %v945
  %1042 = vst [vmem:[%s3 + $0x44] sm:$0xf] %v946
  %1043 = vst [vmem:[%s3 + $0x48] sm:$0xf] %v947
  %1044 = vst [vmem:[%s3 + $0x4c] sm:$0xf] %v948
  %1045 = vst [vmem:[%s3 + $0x50] sm:$0xf] %v949
  %1046 = vst [vmem:[%s3 + $0x54] sm:$0xf] %v950
  %1047 = vst [vmem:[%s3 + $0x58] sm:$0xf] %v951
  %1048 = vst [vmem:[%s3 + $0x5c] sm:$0xf] %v952
  %1049 = vst [vmem:[%s3 + $0x60] sm:$0xf] %v953
  %1050 = vst [vmem:[%s3 + $0x64] sm:$0xf] %v954
  %1051 = vst [vmem:[%s3 + $0x68] sm:$0xf] %v955
  %1052 = vst [vmem:[%s3 + $0x6c] sm:$0xf] %v956
  %1053 = vst [vmem:[%s3 + $0x70] sm:$0xf] %v957
  %1054 = vst [vmem:[%s3 + $0x74] sm:$0xf] %v958
  %1055 = vst [vmem:[%s3 + $0x78] sm:$0xf] %v959
  %1056 = vst [vmem:[%s3 + $0x7c] sm:$0xf] %v960
  %1057 = vst [vmem:[%s3 + $0x80] sm:$0xf] %v961
  %1058 = vst [vmem:[%s3 + $0x84] sm:$0xf] %v962
  %1059 = vst [vmem:[%s3 + $0x88] sm:$0xf] %v963
  %1060 = vst [vmem:[%s3 + $0x8c] sm:$0xf] %v964
  %1061 = vst [vmem:[%s3 + $0x90] sm:$0xf] %v965
  %1062 = vst [vmem:[%s3 + $0x94] sm:$0xf] %v966
  %1063 = vst [vmem:[%s3 + $0x98] sm:$0xf] %v967
  %1064 = vst [vmem:[%s3 + $0x9c] sm:$0xf] %v968
  %1065 = vst [vmem:[%s3 + $0xa0] sm:$0xf] %v969
  %1066 = vst [vmem:[%s3 + $0xa4] sm:$0xf] %v970
  %1067 = vst [vmem:[%s3 + $0xa8] sm:$0xf] %v971
  %1068 = vst [vmem:[%s3 + $0xac] sm:$0xf] %v972
  %1069 = vst [vmem:[%s3 + $0xb0] sm:$0xf] %v973
  %1070 = vst [vmem:[%s3 + $0xb4] sm:$0xf] %v974
  %1071 = vst [vmem:[%s3 + $0xb8] sm:$0xf] %v975
  %1072 = vst [vmem:[%s3 + $0xbc] sm:$0xf] %v976
  // Predicated region
  $region14: #{gcn_layer_forward.2} parent=0 // pred_check
    _
  $region15: #{gcn_layer_forward.2} parent=0 // pred_check_branch
    %1074 = sbr.rel (0) target = $region17
  $region16: #{gcn_layer_forward.2} parent=0 // pred_region
    _
  $region17: #{gcn_layer_forward.2} parent=0 // pred_fallthru
    _
  // Predicated region
  $region18: #{gcn_layer_forward.2} parent=0 // pred_check
    _
  $region19: #{gcn_layer_forward.2} parent=0 // pred_check_branch
    %1076 = sbr.rel (0) target = $region21
  $region20: #{gcn_layer_forward.2} parent=0 // pred_region
    _
  $region21: #{gcn_layer_forward.2} parent=0 // pred_fallthru
    _

// kernel: gcn_layer_forward.3
$region0: #{gcn_layer_forward.3}
  #allocation0 [shape = 'u32[]', space=smem, size = 0x4, offset = 0x4, fixed_abs, tag = 'smem constant byte address 0x4 - core index']
  #allocation1 [shape = 'u32[144,128]{1,0:T(1,128)}', space=vmem, size = 0x12000, scoped, tag = 'internal scratch']
  #allocation2 [shape = 'f32[256,128]{1,0:T(8,128)}', space=vmem, size = 0x20000, scoped, tag = 'scratch operand']
  %s0 = inlined_call_operand.vmem [shape: s8[512,384], index: 0, kind: input, shape index: {}]
  %s1 = inlined_call_operand.vmem [shape: bf16[384,128], index: 1, kind: input, shape index: {}]
  %s2 = inlined_call_operand.vmem [shape: f32[512,1], index: 2, kind: input, shape index: {}]
  %s3 = inlined_call_operand.vmem [shape: f32[1,128], index: 3, kind: input, shape index: {}]
  %s4 = inlined_call_operand.vmem [shape: bf16[512,128], index: 4, kind: output, shape index: {}]
  %s5 = sld [smem:[#allocation0]]
  $region57: #{gcn_layer_forward.3} parent=0
    _
  %s7 = ssub.s32 1, %s5
  %s8 = scalar_select 0, %s7, %s5
  loop: start=0, step=1, limit=4
  $region2: #{gcn_layer_forward.3} parent=0 // loop_pre_header
    _
  $region3: #{gcn_layer_forward.3} parent=0 // loop_header
    %s10 = sphi 0, %s14
    %p11 = scmp.ge.s32.totalorder %s10, 4
    %s17 = sphi 0, %s29
    %s18 = sphi 0, %s25
    %s19 = sphi 0, %s17
    %s20 = sphi 0, %s18
    %s21 = sphi 0, %s19
    %s22 = sphi 0, %s20
    %s34 = sphi 0, %s36
    %s37 = sphi 0, %s34
    %s38 = sphi 0, %s37
    %s54 = sphi 0, %s38
    %s60 = sphi 0, %s62
    %s63 = sphi 0, %s60
    %s64 = sphi 0, %s63
    %s80 = sphi 0, %s64
    %s86 = sphi 0, %s88
    %s89 = sphi 0, %s86
    %s90 = sphi 0, %s89
    %s106 = sphi 0, %s90
    %s110 = sphi 0, %s110
    %s112 = sphi 0, %s110
    %s113 = sphi 0, %s112
    %s127 = sphi 0, %s113
    %s133 = sphi 0, %s135
    %s136 = sphi 0, %s133
    %s137 = sphi 0, %s136
    %s153 = sphi 0, %s137
  $region4: #{gcn_layer_forward.3} parent=0 // loop_header_branch
    %13 = sbr.rel (%p11) target = $region8
  $region5: #{gcn_layer_forward.3} parent=0 // loop_body
    %s15 = ssub.s32 %s10, 1
    %s16 = ssub.s32 %s10, 2
    %s23 = sadd.s32 1, %s18
    %p24 = scmp.ge.s32.totalorder %s23, 1
    %s25 = scalar_select %p24, 0, %s23
    %s26 = sadd.s32 1, %s17
    %s27 = scalar_select %p24, %s26, %s17
    %p28 = scmp.ge.s32.totalorder %s27, 2
    %s29 = scalar_select %p28, 0, %s27
    %s30 = ssub.s32 %s17, %s29
    %s31 = ssub.s32 %s18, %s25
    %s32 = sor.u32 %s30, %s31
    %p33 = scmp.eq.s32.totalorder %s32, 0
    %s35 = sadd.s32 %s34, 1
    %s36 = scalar_select %p33, %s34, %s35
    %p39 = pneg %p33
    %p40 = scmp.eq.s32.totalorder %s10, 1
    %p41 = por %p39, %p40
    %p42 = scmp.ne.s32.totalorder %s34, %s37
    %p43 = scmp.eq.s32.totalorder %s10, 0
    %p44 = por %p42, %p43
    %p45 = scmp.ne.s32.totalorder %s34, %s37
    %p46 = scmp.eq.s32.totalorder %s15, 1
    %p47 = por %p45, %p46
    %p48 = scmp.ne.s32.totalorder %s37, %s38
    %p49 = scmp.eq.s32.totalorder %s15, 0
    %p50 = por %p48, %p49
    %p51 = scmp.ne.s32.totalorder %s37, %s38
    %p52 = scmp.eq.s32.totalorder %s16, 1
    %p53 = por %p51, %p52
    %p55 = scmp.ne.s32.totalorder %s38, %s54
    %p56 = scmp.eq.s32.totalorder %s16, 0
    %p57 = por %p55, %p56
    %s58 = ssub.s32 %s18, %s25
    %p59 = scmp.eq.s32.totalorder %s58, 0
    %s61 = sadd.s32 %s60, 1
    %s62 = scalar_select %p59, %s60, %s61
    %p65 = pneg %p59
    %p66 = scmp.eq.s32.totalorder %s10, 1
    %p67 = por %p65, %p66
    %p68 = scmp.ne.s32.totalorder %s60, %s63
    %p69 = scmp.eq.s32.totalorder %s10, 0
    %p70 = por %p68, %p69
    %p71 = scmp.ne.s32.totalorder %s60, %s63
    %p72 = scmp.eq.s32.totalorder %s15, 1
    %p73 = por %p71, %p72
    %p74 = scmp.ne.s32.totalorder %s63, %s64
    %p75 = scmp.eq.s32.totalorder %s15, 0
    %p76 = por %p74, %p75
    %p77 = scmp.ne.s32.totalorder %s63, %s64
    %p78 = scmp.eq.s32.totalorder %s16, 1
    %p79 = por %p77, %p78
    %p81 = scmp.ne.s32.totalorder %s64, %s80
    %p82 = scmp.eq.s32.totalorder %s16, 0
    %p83 = por %p81, %p82
    %s84 = ssub.s32 %s17, %s29
    %p85 = scmp.eq.s32.totalorder %s84, 0
    %s87 = sadd.s32 %s86, 1
    %s88 = scalar_select %p85, %s86, %s87
    %p91 = pneg %p85
    %p92 = scmp.eq.s32.totalorder %s10, 1
    %p93 = por %p91, %p92
    %p94 = scmp.ne.s32.totalorder %s86, %s89
    %p95 = scmp.eq.s32.totalorder %s10, 0
    %p96 = por %p94, %p95
    %p97 = scmp.ne.s32.totalorder %s86, %s89
    %p98 = scmp.eq.s32.totalorder %s15, 1
    %p99 = por %p97, %p98
    %p100 = scmp.ne.s32.totalorder %s89, %s90
    %p101 = scmp.eq.s32.totalorder %s15, 0
    %p102 = por %p100, %p101
    %p103 = scmp.ne.s32.totalorder %s89, %s90
    %p104 = scmp.eq.s32.totalorder %s16, 1
    %p105 = por %p103, %p104
    %p107 = scmp.ne.s32.totalorder %s90, %s106
    %p108 = scmp.eq.s32.totalorder %s16, 0
    %p109 = por %p107, %p108
    %s111 = sadd.s32 %s110, 1
    %p114 = scmp.eq.s32.totalorder %s10, 1
    %p115 = scmp.ne.s32.totalorder %s110, %s112
    %p116 = scmp.eq.s32.totalorder %s10, 0
    %p117 = por %p115, %p116
    %p118 = scmp.ne.s32.totalorder %s110, %s112
    %p119 = scmp.eq.s32.totalorder %s15, 1
    %p120 = por %p118, %p119
    %p121 = scmp.ne.s32.totalorder %s112, %s113
    %p122 = scmp.eq.s32.totalorder %s15, 0
    %p123 = por %p121, %p122
    %p124 = scmp.ne.s32.totalorder %s112, %s113
    %p125 = scmp.eq.s32.totalorder %s16, 1
    %p126 = por %p124, %p125
    %p128 = scmp.ne.s32.totalorder %s113, %s127
    %p129 = scmp.eq.s32.totalorder %s16, 0
    %p130 = por %p128, %p129
    %s131 = ssub.s32 %s17, %s29
    %p132 = scmp.eq.s32.totalorder %s131, 0
    %s134 = sadd.s32 %s133, 1
    %s135 = scalar_select %p132, %s133, %s134
    %p138 = pneg %p132
    %p139 = scmp.eq.s32.totalorder %s10, 1
    %p140 = por %p138, %p139
    %p141 = scmp.ne.s32.totalorder %s133, %s136
    %p142 = scmp.eq.s32.totalorder %s10, 0
    %p143 = por %p141, %p142
    %p144 = scmp.ne.s32.totalorder %s133, %s136
    %p145 = scmp.eq.s32.totalorder %s15, 1
    %p146 = por %p144, %p145
    %p147 = scmp.ne.s32.totalorder %s136, %s137
    %p148 = scmp.eq.s32.totalorder %s15, 0
    %p149 = por %p147, %p148
    %p150 = scmp.ne.s32.totalorder %s136, %s137
    %p151 = scmp.eq.s32.totalorder %s16, 1
    %p152 = por %p150, %p151
    %p154 = scmp.ne.s32.totalorder %s137, %s153
    %p155 = scmp.eq.s32.totalorder %s16, 0
    %p156 = por %p154, %p155
    %p157 = scmp.le.s32.totalorder 1, %s10
    %p158 = scmp.lt.s32.totalorder %s10, 3
    %p159 = pnand %p157, %p158
    %p160 = pneg %p159
    // Predicated region
    $region9: #{gcn_layer_forward.3} parent=5 // pred_check
      _
    $region10: #{gcn_layer_forward.3} parent=5 // pred_check_branch
      %162 = sbr.rel (%p159) target = $region12
    $region11: #{gcn_layer_forward.3} parent=5 // pred_region
      %s163 = ssub.s32 %s10, 1
      // Predicated region
      $region13: #{gcn_layer_forward.3} parent=11 // pred_check
        %p164 = pneg %p76
      $region14: #{gcn_layer_forward.3} parent=11 // pred_check_branch
        %166 = sbr.rel (%p164) target = $region16
      $region15: #{gcn_layer_forward.3} parent=11 // pred_region
        %s167 = smul.u32 48, %s20
        %p168 = scmp.lt.s32.totalorder %s167, 47
        %s169 = scalar_select %p168, %s167, 47
        %s170 = smul.addr %s169, 4
        %s171 = scalar_lea.vmem %s1, %s170
        %s172 = smul.u32 48, %s20
      $region16: #{gcn_layer_forward.3} parent=11 // pred_fallthru
        _
      // Predicated region
      $region17: #{gcn_layer_forward.3} parent=11 // pred_check
        %p173 = pneg %p123
      $region18: #{gcn_layer_forward.3} parent=11 // pred_check_branch
        %175 = sbr.rel (%p173) target = $region20
      $region19: #{gcn_layer_forward.3} parent=11 // pred_region
        _
      $region20: #{gcn_layer_forward.3} parent=11 // pred_fallthru
        _
    $region12: #{gcn_layer_forward.3} parent=5 // pred_fallthru
      _
    %p176 = scmp.lt.s32.totalorder %s10, 2
    // Predicated region
    $region21: #{gcn_layer_forward.3} parent=5 // pred_check
      %p177 = pneg %p176
    $region22: #{gcn_layer_forward.3} parent=5 // pred_check_branch
      %179 = sbr.rel (%p177) target = $region24
    $region23: #{gcn_layer_forward.3} parent=5 // pred_region
      // Predicated region
      $region25: #{gcn_layer_forward.3} parent=23 // pred_check
        %p180 = pneg %p44
      $region26: #{gcn_layer_forward.3} parent=23 // pred_check_branch
        %182 = sbr.rel (%p180) target = $region28
      $region27: #{gcn_layer_forward.3} parent=23 // pred_region
        %s183 = smul.u32 8, %s17
        %s184 = smul.u32 3, %s18
        %p185 = scmp.lt.s32.totalorder %s183, 15
        %s186 = scalar_select %p185, %s183, 15
        %p187 = scmp.lt.s32.totalorder %s184, 2
        %s188 = scalar_select %p187, %s184, 2
        %s189 = smul.addr %s186, 3
        %s190 = sadd.s32 %s188, %s189
        %s191 = smul.addr %s190, 8
        %s192 = scalar_lea.vmem %s0, %s191
        %s193 = smul.u32 8, %s17
        %s194 = smul.u32 3, %s18
      $region28: #{gcn_layer_forward.3} parent=23 // pred_fallthru
        _
      // Predicated region
      $region29: #{gcn_layer_forward.3} parent=23 // pred_check
        %p195 = pneg %p96
      $region30: #{gcn_layer_forward.3} parent=23 // pred_check_branch
        %197 = sbr.rel (%p195) target = $region32
      $region31: #{gcn_layer_forward.3} parent=23 // pred_region
        %s198 = smul.u32 32, %s17
        %p199 = scmp.lt.s32.totalorder %s198, 63
        %s200 = scalar_select %p199, %s198, 63
        %s201 = smul.addr %s200, 8
        %s202 = scalar_lea.vmem %s2, %s201
        %s203 = smul.u32 32, %s17
      $region32: #{gcn_layer_forward.3} parent=23 // pred_fallthru
        _
    $region24: #{gcn_layer_forward.3} parent=5 // pred_fallthru
      _
    %p204 = scmp.le.s32.totalorder 1, %s10
    %p205 = scmp.lt.s32.totalorder %s10, 3
    %p206 = pnand %p204, %p205
    %p207 = pneg %p206
    // Predicated region
    $region33: #{gcn_layer_forward.3} parent=5 // pred_check
      _
    $region34: #{gcn_layer_forward.3} parent=5 // pred_check_branch
      %209 = sbr.rel (%p206) target = $region36
    $region35: #{gcn_layer_forward.3} parent=5 // pred_region
      %s210 = ssub.s32 %s10, 1
      %s211 = smul.u32 8, %s19
      %s212 = smul.u32 3, %s20
      %p213 = scmp.lt.s32.totalorder %s211, 15
      %s214 = scalar_select %p213, %s211, 15
      %p215 = scmp.lt.s32.totalorder %s212, 2
      %s216 = scalar_select %p215, %s212, 2
      %s217 = smul.addr %s214, 3
      %s218 = sadd.s32 %s216, %s217
      %s219 = smul.addr %s218, 8
      %s220 = scalar_lea.vmem %s0, %s219
      %p221 = pneg %p50
      %p222 = pneg %p47
      %s223 = smul.u32 48, %s20
      %p224 = scmp.lt.s32.totalorder %s223, 47
      %s225 = scalar_select %p224, %s223, 47
      %s226 = smul.addr %s225, 4
      %s227 = scalar_lea.vmem %s1, %s226
      %p228 = pneg %p76
      %p229 = pneg %p73
      %s230 = smul.u32 32, %s19
      %p231 = scmp.lt.s32.totalorder %s230, 63
      %s232 = scalar_select %p231, %s230, 63
      %s233 = smul.addr %s232, 8
      %s234 = scalar_lea.vmem %s2, %s233
      %p235 = pneg %p102
      %p236 = pneg %p99
      %p237 = pneg %p123
      %p238 = pneg %p120
      %p239 = pneg %p149
      %p240 = pneg %p146
      %s241 = smul.u32 32, %s19
      %p242 = scmp.lt.s32.totalorder %s241, 63
      %s243 = scalar_select %p242, %s241, 63
      %s244 = smul.addr %s243, 4
      %s245 = scalar_lea.vmem %s4, %s244
      %s246 = smul.u32 8, %s19
      %s247 = smul.u32 3, %s20
      %p248 = scmp.lt.s32.totalorder %s246, 15
      %s249 = scalar_select %p248, %s246, 15
      %p250 = scmp.lt.s32.totalorder %s247, 2
      %s251 = scalar_select %p250, %s247, 2
      %s252 = smul.addr %s249, 3
      %s253 = sadd.s32 %s251, %s252
      %s254 = smul.addr %s253, 8
      %s255 = scalar_lea.vmem %s0, %s254
      %s256 = smul.u32 8, %s19
      %s257 = smul.u32 3, %s20
      %s258 = smul.u32 48, %s20
      %p259 = scmp.lt.s32.totalorder %s258, 47
      %s260 = scalar_select %p259, %s258, 47
      %s261 = smul.addr %s260, 4
      %s262 = scalar_lea.vmem %s1, %s261
      %s263 = smul.u32 48, %s20
      %s264 = smul.u32 32, %s19
      %p265 = scmp.lt.s32.totalorder %s264, 63
      %s266 = scalar_select %p265, %s264, 63
      %s267 = smul.addr %s266, 8
      %s268 = scalar_lea.vmem %s2, %s267
      %s269 = smul.u32 32, %s19
      %s270 = smul.u32 32, %s19
      %p271 = scmp.lt.s32.totalorder %s270, 63
      %s272 = scalar_select %p271, %s270, 63
      %s273 = smul.addr %s272, 4
      %s274 = scalar_lea.vmem %s4, %s273
      %s275 = smul.u32 32, %s19
      %p277 = scmp.eq.s32.totalorder %s20, 0
      // Predicated region
      $region37: #{gcn_layer_forward.3} parent=35 // pred_check
        %p278 = pneg %p277
      $region38: #{gcn_layer_forward.3} parent=35 // pred_check_branch
        %280 = sbr.rel (%p278) target = $region40
      $region39: #{gcn_layer_forward.3} parent=35 // pred_region
        %281 = vst [vmem:[#allocation2] sm:$0xff] 0.0
        %282 = vst [vmem:[#allocation2 + $0x8] sm:$0xff] 0.0
        %283 = vst [vmem:[#allocation2 + $0x10] sm:$0xff] 0.0
        %284 = vst [vmem:[#allocation2 + $0x18] sm:$0xff] 0.0
        %285 = vst [vmem:[#allocation2 + $0x20] sm:$0xff] 0.0
        %286 = vst [vmem:[#allocation2 + $0x28] sm:$0xff] 0.0
        %287 = vst [vmem:[#allocation2 + $0x30] sm:$0xff] 0.0
        %288 = vst [vmem:[#allocation2 + $0x38] sm:$0xff] 0.0
        %289 = vst [vmem:[#allocation2 + $0x40] sm:$0xff] 0.0
        %290 = vst [vmem:[#allocation2 + $0x48] sm:$0xff] 0.0
        %291 = vst [vmem:[#allocation2 + $0x50] sm:$0xff] 0.0
        %292 = vst [vmem:[#allocation2 + $0x58] sm:$0xff] 0.0
        %293 = vst [vmem:[#allocation2 + $0x60] sm:$0xff] 0.0
        %294 = vst [vmem:[#allocation2 + $0x68] sm:$0xff] 0.0
        %295 = vst [vmem:[#allocation2 + $0x70] sm:$0xff] 0.0
        %296 = vst [vmem:[#allocation2 + $0x78] sm:$0xff] 0.0
        %297 = vst [vmem:[#allocation2 + $0x80] sm:$0xff] 0.0
        %298 = vst [vmem:[#allocation2 + $0x88] sm:$0xff] 0.0
        %299 = vst [vmem:[#allocation2 + $0x90] sm:$0xff] 0.0
        %300 = vst [vmem:[#allocation2 + $0x98] sm:$0xff] 0.0
        %301 = vst [vmem:[#allocation2 + $0xa0] sm:$0xff] 0.0
        %302 = vst [vmem:[#allocation2 + $0xa8] sm:$0xff] 0.0
        %303 = vst [vmem:[#allocation2 + $0xb0] sm:$0xff] 0.0
        %304 = vst [vmem:[#allocation2 + $0xb8] sm:$0xff] 0.0
        %305 = vst [vmem:[#allocation2 + $0xc0] sm:$0xff] 0.0
        %306 = vst [vmem:[#allocation2 + $0xc8] sm:$0xff] 0.0
        %307 = vst [vmem:[#allocation2 + $0xd0] sm:$0xff] 0.0
        %308 = vst [vmem:[#allocation2 + $0xd8] sm:$0xff] 0.0
        %309 = vst [vmem:[#allocation2 + $0xe0] sm:$0xff] 0.0
        %310 = vst [vmem:[#allocation2 + $0xe8] sm:$0xff] 0.0
        %311 = vst [vmem:[#allocation2 + $0xf0] sm:$0xff] 0.0
        %312 = vst [vmem:[#allocation2 + $0xf8] sm:$0xff] 0.0
      $region40: #{gcn_layer_forward.3} parent=35 // pred_fallthru
        _
      %v313 = vld [vmem:[%s255] sm:$0xff]
      %v314 = vld [vmem:[%s255 + $0x8] sm:$0xff]
      %v315 = vld [vmem:[%s255 + $0x10] sm:$0xff]
      %v316 = vld [vmem:[%s255 + $0x18] sm:$0xff]
      %v317 = vld [vmem:[%s255 + $0x20] sm:$0xff]
      %v318 = vld [vmem:[%s255 + $0x28] sm:$0xff]
      %v319 = vld [vmem:[%s255 + $0x30] sm:$0xff]
      %v320 = vld [vmem:[%s255 + $0x38] sm:$0xff]
      %v321 = vld [vmem:[%s255 + $0x40] sm:$0xff]
      %v322 = vld [vmem:[%s255 + $0x48] sm:$0xff]
      %v323 = vld [vmem:[%s255 + $0x50] sm:$0xff]
      %v324 = vld [vmem:[%s255 + $0x58] sm:$0xff]
      %v325 = vld [vmem:[%s255 + $0x60] sm:$0xff]
      %v326 = vld [vmem:[%s255 + $0x68] sm:$0xff]
      %v327 = vld [vmem:[%s255 + $0x70] sm:$0xff]
      %v328 = vld [vmem:[%s255 + $0x78] sm:$0xff]
      %v329 = vld [vmem:[%s255 + $0x80] sm:$0xff]
      %v330 = vld [vmem:[%s255 + $0x88] sm:$0xff]
      %v331 = vld [vmem:[%s255 + $0x90] sm:$0xff]
      %v332 = vld [vmem:[%s255 + $0x98] sm:$0xff]
      %v333 = vld [vmem:[%s255 + $0xa0] sm:$0xff]
      %v334 = vld [vmem:[%s255 + $0xa8] sm:$0xff]
      %v335 = vld [vmem:[%s255 + $0xb0] sm:$0xff]
      %v336 = vld [vmem:[%s255 + $0xb8] sm:$0xff]
      %v337 = vunpack.c.l.s8.bf16 %v313
      %v338 = vunpack.c.l.s8.bf16 %v314
      %v339 = vunpack.c.l.s8.bf16 %v315
      %v340 = vunpack.c.h.s8.bf16 %v313
      %v341 = vunpack.c.h.s8.bf16 %v314
      %v342 = vunpack.c.h.s8.bf16 %v315
      %v343 = vunpack.c.l.s8.bf16 %v316
      %v344 = vunpack.c.l.s8.bf16 %v317
      %v345 = vunpack.c.l.s8.bf16 %v318
      %v346 = vunpack.c.h.s8.bf16 %v316
      %v347 = vunpack.c.h.s8.bf16 %v317
      %v348 = vunpack.c.h.s8.bf16 %v318
      %v349 = vunpack.c.l.s8.bf16 %v319
      %v350 = vunpack.c.l.s8.bf16 %v320
      %v351 = vunpack.c.l.s8.bf16 %v321
      %v352 = vunpack.c.h.s8.bf16 %v319
      %v353 = vunpack.c.h.s8.bf16 %v320
      %v354 = vunpack.c.h.s8.bf16 %v321
      %v355 = vunpack.c.l.s8.bf16 %v322
      %v356 = vunpack.c.l.s8.bf16 %v323
      %v357 = vunpack.c.l.s8.bf16 %v324
      %v358 = vunpack.c.h.s8.bf16 %v322
      %v359 = vunpack.c.h.s8.bf16 %v323
      %v360 = vunpack.c.h.s8.bf16 %v324
      %v361 = vunpack.c.l.s8.bf16 %v325
      %v362 = vunpack.c.l.s8.bf16 %v326
      %v363 = vunpack.c.l.s8.bf16 %v327
      %v364 = vunpack.c.h.s8.bf16 %v325
      %v365 = vunpack.c.h.s8.bf16 %v326
      %v366 = vunpack.c.h.s8.bf16 %v327
      %v367 = vunpack.c.l.s8.bf16 %v328
      %v368 = vunpack.c.l.s8.bf16 %v329
      %v369 = vunpack.c.l.s8.bf16 %v330
      %v370 = vunpack.c.h.s8.bf16 %v328
      %v371 = vunpack.c.h.s8.bf16 %v329
      %v372 = vunpack.c.h.s8.bf16 %v330
      %v373 = vunpack.c.l.s8.bf16 %v331
      %v374 = vunpack.c.l.s8.bf16 %v332
      %v375 = vunpack.c.l.s8.bf16 %v333
      %v376 = vunpack.c.h.s8.bf16 %v331
      %v377 = vunpack.c.h.s8.bf16 %v332
      %v378 = vunpack.c.h.s8.bf16 %v333
      %v379 = vunpack.c.l.s8.bf16 %v334
      %v380 = vunpack.c.l.s8.bf16 %v335
      %v381 = vunpack.c.l.s8.bf16 %v336
      %v382 = vunpack.c.h.s8.bf16 %v334
      %v383 = vunpack.c.h.s8.bf16 %v335
      %v384 = vunpack.c.h.s8.bf16 %v336
      %v385 = vld [vmem:[#allocation2] sm:$0xff]
      %v386 = vld [vmem:[#allocation2 + $0x8] sm:$0xff]
      %v387 = vld [vmem:[#allocation2 + $0x10] sm:$0xff]
      %v388 = vld [vmem:[#allocation2 + $0x18] sm:$0xff]
      %v389 = vld [vmem:[#allocation2 + $0x20] sm:$0xff]
      %v390 = vld [vmem:[#allocation2 + $0x28] sm:$0xff]
      %v391 = vld [vmem:[#allocation2 + $0x30] sm:$0xff]
      %v392 = vld [vmem:[#allocation2 + $0x38] sm:$0xff]
      %v393 = vld [vmem:[#allocation2 + $0x40] sm:$0xff]
      %v394 = vld [vmem:[#allocation2 + $0x48] sm:$0xff]
      %v395 = vld [vmem:[#allocation2 + $0x50] sm:$0xff]
      %v396 = vld [vmem:[#allocation2 + $0x58] sm:$0xff]
      %v397 = vld [vmem:[#allocation2 + $0x60] sm:$0xff]
      %v398 = vld [vmem:[#allocation2 + $0x68] sm:$0xff]
      %v399 = vld [vmem:[#allocation2 + $0x70] sm:$0xff]
      %v400 = vld [vmem:[#allocation2 + $0x78] sm:$0xff]
      %v401 = vld [vmem:[#allocation2 + $0x80] sm:$0xff]
      %v402 = vld [vmem:[#allocation2 + $0x88] sm:$0xff]
      %v403 = vld [vmem:[#allocation2 + $0x90] sm:$0xff]
      %v404 = vld [vmem:[#allocation2 + $0x98] sm:$0xff]
      %v405 = vld [vmem:[#allocation2 + $0xa0] sm:$0xff]
      %v406 = vld [vmem:[#allocation2 + $0xa8] sm:$0xff]
      %v407 = vld [vmem:[#allocation2 + $0xb0] sm:$0xff]
      %v408 = vld [vmem:[#allocation2 + $0xb8] sm:$0xff]
      %v409 = vld [vmem:[#allocation2 + $0xc0] sm:$0xff]
      %v410 = vld [vmem:[#allocation2 + $0xc8] sm:$0xff]
      %v411 = vld [vmem:[#allocation2 + $0xd0] sm:$0xff]
      %v412 = vld [vmem:[#allocation2 + $0xd8] sm:$0xff]
      %v413 = vld [vmem:[#allocation2 + $0xe0] sm:$0xff]
      %v414 = vld [vmem:[#allocation2 + $0xe8] sm:$0xff]
      %v415 = vld [vmem:[#allocation2 + $0xf0] sm:$0xff]
      %v416 = vld [vmem:[#allocation2 + $0xf8] sm:$0xff]
      %v417 = vld [vmem:[%s262] sm:$0xf]
      %v418 = vld [vmem:[%s262 + $0x4] sm:$0xf]
      %v419 = vld [vmem:[%s262 + $0x8] sm:$0xf]
      %v420 = vld [vmem:[%s262 + $0xc] sm:$0xf]
      %v421 = vld [vmem:[%s262 + $0x10] sm:$0xf]
      %v422 = vld [vmem:[%s262 + $0x14] sm:$0xf]
      %v423 = vld [vmem:[%s262 + $0x18] sm:$0xf]
      %v424 = vld [vmem:[%s262 + $0x1c] sm:$0xf]
      %v425 = vld [vmem:[%s262 + $0x20] sm:$0xf]
      %v426 = vld [vmem:[%s262 + $0x24] sm:$0xf]
      %v427 = vld [vmem:[%s262 + $0x28] sm:$0xf]
      %v428 = vld [vmem:[%s262 + $0x2c] sm:$0xf]
      %v429 = vld [vmem:[%s262 + $0x30] sm:$0xf]
      %v430 = vld [vmem:[%s262 + $0x34] sm:$0xf]
      %v431 = vld [vmem:[%s262 + $0x38] sm:$0xf]
      %v432 = vld [vmem:[%s262 + $0x3c] sm:$0xf]
      %v433 = vld [vmem:[%s262 + $0x40] sm:$0xf]
      %v434 = vld [vmem:[%s262 + $0x44] sm:$0xf]
      %v435 = vld [vmem:[%s262 + $0x48] sm:$0xf]
      %v436 = vld [vmem:[%s262 + $0x4c] sm:$0xf]
      %v437 = vld [vmem:[%s262 + $0x50] sm:$0xf]
      %v438 = vld [vmem:[%s262 + $0x54] sm:$0xf]
      %v439 = vld [vmem:[%s262 + $0x58] sm:$0xf]
      %v440 = vld [vmem:[%s262 + $0x5c] sm:$0xf]
      %v441 = vld [vmem:[%s262 + $0x60] sm:$0xf]
      %v442 = vld [vmem:[%s262 + $0x64] sm:$0xf]
      %v443 = vld [vmem:[%s262 + $0x68] sm:$0xf]
      %v444 = vld [vmem:[%s262 + $0x6c] sm:$0xf]
      %v445 = vld [vmem:[%s262 + $0x70] sm:$0xf]
      %v446 = vld [vmem:[%s262 + $0x74] sm:$0xf]
      %v447 = vld [vmem:[%s262 + $0x78] sm:$0xf]
      %v448 = vld [vmem:[%s262 + $0x7c] sm:$0xf]
      %v449 = vld [vmem:[%s262 + $0x80] sm:$0xf]
      %v450 = vld [vmem:[%s262 + $0x84] sm:$0xf]
      %v451 = vld [vmem:[%s262 + $0x88] sm:$0xf]
      %v452 = vld [vmem:[%s262 + $0x8c] sm:$0xf]
      %v453 = vld [vmem:[%s262 + $0x90] sm:$0xf]
      %v454 = vld [vmem:[%s262 + $0x94] sm:$0xf]
      %v455 = vld [vmem:[%s262 + $0x98] sm:$0xf]
      %v456 = vld [vmem:[%s262 + $0x9c] sm:$0xf]
      %v457 = vld [vmem:[%s262 + $0xa0] sm:$0xf]
      %v458 = vld [vmem:[%s262 + $0xa4] sm:$0xf]
      %v459 = vld [vmem:[%s262 + $0xa8] sm:$0xf]
      %v460 = vld [vmem:[%s262 + $0xac] sm:$0xf]
      %v461 = vld [vmem:[%s262 + $0xb0] sm:$0xf]
      %v462 = vld [vmem:[%s262 + $0xb4] sm:$0xf]
      %v463 = vld [vmem:[%s262 + $0xb8] sm:$0xf]
      %v464 = vld [vmem:[%s262 + $0xbc] sm:$0xf]
      %v513 = vunpack.c.l.b16 %v417
      %v514 = vunpack.c.l.b16 %v418
      %v515 = vunpack.c.l.b16 %v419
      %v516 = vunpack.c.l.b16 %v420
      %v517 = vunpack.c.l.b16 %v421
      %v518 = vunpack.c.l.b16 %v422
      %v519 = vunpack.c.l.b16 %v423
      %v520 = vunpack.c.l.b16 %v424
      %v521 = vunpack.c.l.b16 %v425
      %v522 = vunpack.c.l.b16 %v426
      %v523 = vunpack.c.l.b16 %v427
      %v524 = vunpack.c.l.b16 %v428
      %v525 = vunpack.c.l.b16 %v429
      %v526 = vunpack.c.l.b16 %v430
      %v527 = vunpack.c.l.b16 %v431
      %v528 = vunpack.c.l.b16 %v432
      %v529 = vunpack.c.l.b16 %v433
      %v530 = vunpack.c.l.b16 %v434
      %v531 = vunpack.c.l.b16 %v435
      %v532 = vunpack.c.l.b16 %v436
      %v533 = vunpack.c.l.b16 %v437
      %v534 = vunpack.c.l.b16 %v438
      %v535 = vunpack.c.l.b16 %v439
      %v536 = vunpack.c.l.b16 %v440
      %v537 = vunpack.c.l.b16 %v441
      %v538 = vunpack.c.l.b16 %v442
      %v539 = vunpack.c.l.b16 %v443
      %v540 = vunpack.c.l.b16 %v444
      %v541 = vunpack.c.l.b16 %v445
      %v542 = vunpack.c.l.b16 %v446
      %v543 = vunpack.c.l.b16 %v447
      %v544 = vunpack.c.l.b16 %v448
      %v545 = vunpack.c.l.b16 %v449
      %v546 = vunpack.c.l.b16 %v450
      %v547 = vunpack.c.l.b16 %v451
      %v548 = vunpack.c.l.b16 %v452
      %v549 = vunpack.c.l.b16 %v453
      %v550 = vunpack.c.l.b16 %v454
      %v551 = vunpack.c.l.b16 %v455
      %v552 = vunpack.c.l.b16 %v456
      %v553 = vunpack.c.l.b16 %v457
      %v554 = vunpack.c.l.b16 %v458
      %v555 = vunpack.c.l.b16 %v459
      %v556 = vunpack.c.l.b16 %v460
      %v557 = vunpack.c.l.b16 %v461
      %v558 = vunpack.c.l.b16 %v462
      %v559 = vunpack.c.l.b16 %v463
      %v560 = vunpack.c.l.b16 %v464
      %v561 = vpack.c.b16 %v514, %v513
      %v562 = vpack.c.b16 %v516, %v515
      %v563 = vpack.c.b16 %v518, %v517
      %v564 = vpack.c.b16 %v520, %v519
      %v565 = vpack.c.b16 %v522, %v521
      %v566 = vpack.c.b16 %v524, %v523
      %v567 = vpack.c.b16 %v526, %v525
      %v568 = vpack.c.b16 %v528, %v527
      %v569 = vpack.c.b16 %v530, %v529
      %v570 = vpack.c.b16 %v532, %v531
      %v571 = vpack.c.b16 %v534, %v533
      %v572 = vpack.c.b16 %v536, %v535
      %v573 = vpack.c.b16 %v538, %v537
      %v574 = vpack.c.b16 %v540, %v539
      %v575 = vpack.c.b16 %v542, %v541
      %v576 = vpack.c.b16 %v544, %v543
      %v577 = vpack.c.b16 %v546, %v545
      %v578 = vpack.c.b16 %v548, %v547
      %v579 = vpack.c.b16 %v550, %v549
      %v580 = vpack.c.b16 %v552, %v551
      %v581 = vpack.c.b16 %v554, %v553
      %v582 = vpack.c.b16 %v556, %v555
      %v583 = vpack.c.b16 %v558, %v557
      %v584 = vpack.c.b16 %v560, %v559
      %609 = vmatprep.subr.bf16.mxu0 0
      %610 = vmatpush1.bf16.msra.mxu0 %v561
      %611 = vmatprep.subr.bf16.mxu0 0
      %612 = vmatpush1.bf16.msra.mxu0 %v562
      %613 = vmatprep.subr.bf16.mxu0 0
      %614 = vmatpush1.bf16.msra.mxu0 %v563
      %615 = vmatprep.subr.bf16.mxu0 0
      %616 = vmatpush1.bf16.msra.mxu0 %v564
      %617 = vmatprep.subr.bf16.mxu0 0
      %618 = vmatpush1.bf16.msra.mxu0 %v565
      %619 = vmatprep.subr.bf16.mxu0 0
      %620 = vmatpush1.bf16.msra.mxu0 %v566
      %621 = vmatprep.subr.bf16.mxu0 0
      %622 = vmatpush1.bf16.msra.mxu0 %v567
      %623 = vmatprep.subr.bf16.mxu0 0
      %624 = vmatpush1.bf16.msra.mxu0 %v568
      %625 = vmatprep.subr.bf16.mxu0 0
      %626 = vmatpush1.bf16.msra.mxu0 %v569
      %627 = vmatprep.subr.bf16.mxu0 0
      %628 = vmatpush1.bf16.msra.mxu0 %v570
      %629 = vmatprep.subr.bf16.mxu0 0
      %630 = vmatpush1.bf16.msra.mxu0 %v571
      %631 = vmatprep.subr.bf16.mxu0 0
      %632 = vmatpush1.bf16.msra.mxu0 %v572
      %633 = vmatprep.subr.bf16.mxu0 0
      %634 = vmatpush1.bf16.msra.mxu0 %v573
      %635 = vmatprep.subr.bf16.mxu0 0
      %636 = vmatpush1.bf16.msra.mxu0 %v574
      %637 = vmatprep.subr.bf16.mxu0 0
      %638 = vmatpush1.bf16.msra.mxu0 %v575
      %639 = vmatprep.subr.bf16.mxu0 0
      %640 = vmatpush1.bf16.msra.mxu0 %v576
      %641 = vmatprep.mubr.bf16.mxu0 %v338
      %642 = vmatmul.mubr.bf16.gmra.mrb[0].mxu0 %v337
      %v643 = vpop.f32.mrb[0].mxu0
      %v644 = vadd.f32 0.0, %v643
      %v645 = vpop.f32.mrb[0].mxu0
      %v646 = vpop.f32.mrb[0].mxu0
      %v647 = vadd.f32 0.0, %v646
      %v648 = vpop.f32.mrb[0].mxu0
      %649 = vmatprep.mubr.bf16.mxu0 %v341
      %650 = vmatmul.mubr.bf16.gmra.mrb[0].mxu0 %v340
      %v651 = vpop.f32.mrb[0].mxu0
      %v652 = vadd.f32 0.0, %v651
      %v653 = vpop.f32.mrb[0].mxu0
      %v654 = vpop.f32.mrb[0].mxu0
      %v655 = vadd.f32 0.0, %v654
      %v656 = vpop.f32.mrb[0].mxu0
      %657 = vmatprep.mubr.bf16.mxu0 %v344
      %658 = vmatmul.mubr.bf16.gmra.mrb[0].mxu0 %v343
      %v659 = vpop.f32.mrb[0].mxu0
      %v660 = vadd.f32 0.0, %v659
      %v661 = vpop.f32.mrb[0].mxu0
      %v662 = vpop.f32.mrb[0].mxu0
      %v663 = vadd.f32 0.0, %v662
      %v664 = vpop.f32.mrb[0].mxu0
      %665 = vmatprep.mubr.bf16.mxu0 %v347
      %666 = vmatmul.mubr.bf16.gmra.mrb[0].mxu0 %v346
      %v667 = vpop.f32.mrb[0].mxu0
      %v668 = vadd.f32 0.0, %v667
      %v669 = vpop.f32.mrb[0].mxu0
      %v670 = vpop.f32.mrb[0].mxu0
      %v671 = vadd.f32 0.0, %v670
      %v672 = vpop.f32.mrb[0].mxu0
      %673 = vmatprep.mubr.bf16.mxu0 %v350
      %674 = vmatmul.mubr.bf16.gmra.mrb[0].mxu0 %v349
      %v675 = vpop.f32.mrb[0].mxu0
      %v676 = vadd.f32 0.0, %v675
      %v677 = vpop.f32.mrb[0].mxu0
      %v678 = vpop.f32.mrb[0].mxu0
      %v679 = vadd.f32 0.0, %v678
      %v680 = vpop.f32.mrb[0].mxu0
      %681 = vmatprep.mubr.bf16.mxu0 %v353
      %682 = vmatmul.mubr.bf16.gmra.mrb[0].mxu0 %v352
      %v683 = vpop.f32.mrb[0].mxu0
      %v684 = vadd.f32 0.0, %v683
      %v685 = vpop.f32.mrb[0].mxu0
      %v686 = vpop.f32.mrb[0].mxu0
      %v687 = vadd.f32 0.0, %v686
      %v688 = vpop.f32.mrb[0].mxu0
      %689 = vmatprep.mubr.bf16.mxu0 %v356
      %690 = vmatmul.mubr.bf16.gmra.mrb[0].mxu0 %v355
      %v691 = vpop.f32.mrb[0].mxu0
      %v692 = vadd.f32 0.0, %v691
      %v693 = vpop.f32.mrb[0].mxu0
      %v694 = vpop.f32.mrb[0].mxu0
      %v695 = vadd.f32 0.0, %v694
      %v696 = vpop.f32.mrb[0].mxu0
      %697 = vmatprep.mubr.bf16.mxu0 %v359
      %698 = vmatmul.mubr.bf16.gmra.mrb[0].mxu0 %v358
      %v699 = vpop.f32.mrb[0].mxu0
      %v700 = vadd.f32 0.0, %v699
      %v701 = vpop.f32.mrb[0].mxu0
      %v702 = vpop.f32.mrb[0].mxu0
      %v703 = vadd.f32 0.0, %v702
      %v704 = vpop.f32.mrb[0].mxu0
      %705 = vmatprep.mubr.bf16.mxu0 %v362
      %706 = vmatmul.mubr.bf16.gmra.mrb[0].mxu0 %v361
      %v707 = vpop.f32.mrb[0].mxu0
      %v708 = vadd.f32 0.0, %v707
      %v709 = vpop.f32.mrb[0].mxu0
      %v710 = vpop.f32.mrb[0].mxu0
      %v711 = vadd.f32 0.0, %v710
      %v712 = vpop.f32.mrb[0].mxu0
      %713 = vmatprep.mubr.bf16.mxu0 %v365
      %714 = vmatmul.mubr.bf16.gmra.mrb[0].mxu0 %v364
      %v715 = vpop.f32.mrb[0].mxu0
      %v716 = vadd.f32 0.0, %v715
      %v717 = vpop.f32.mrb[0].mxu0
      %v718 = vpop.f32.mrb[0].mxu0
      %v719 = vadd.f32 0.0, %v718
      %v720 = vpop.f32.mrb[0].mxu0
      %721 = vmatprep.mubr.bf16.mxu0 %v368
      %722 = vmatmul.mubr.bf16.gmra.mrb[0].mxu0 %v367
      %v723 = vpop.f32.mrb[0].mxu0
      %v724 = vadd.f32 0.0, %v723
      %v725 = vpop.f32.mrb[0].mxu0
      %v726 = vpop.f32.mrb[0].mxu0
      %v727 = vadd.f32 0.0, %v726
      %v728 = vpop.f32.mrb[0].mxu0
      %729 = vmatprep.mubr.bf16.mxu0 %v371
      %730 = vmatmul.mubr.bf16.gmra.mrb[0].mxu0 %v370
      %v731 = vpop.f32.mrb[0].mxu0
      %v732 = vadd.f32 0.0, %v731
      %v733 = vpop.f32.mrb[0].mxu0
      %v734 = vpop.f32.mrb[0].mxu0
      %v735 = vadd.f32 0.0, %v734
      %v736 = vpop.f32.mrb[0].mxu0
      %737 = vmatprep.mubr.bf16.mxu0 %v374
      %738 = vmatmul.mubr.bf16.gmra.mrb[0].mxu0 %v373
      %v739 = vpop.f32.mrb[0].mxu0
      %v740 = vadd.f32 0.0, %v739
      %v741 = vpop.f32.mrb[0].mxu0
      %v742 = vpop.f32.mrb[0].mxu0
      %v743 = vadd.f32 0.0, %v742
      %v744 = vpop.f32.mrb[0].mxu0
      %745 = vmatprep.mubr.bf16.mxu0 %v377
      %746 = vmatmul.mubr.bf16.gmra.mrb[0].mxu0 %v376
      %v747 = vpop.f32.mrb[0].mxu0
      %v748 = vadd.f32 0.0, %v747
      %v749 = vpop.f32.mrb[0].mxu0
      %v750 = vpop.f32.mrb[0].mxu0
      %v751 = vadd.f32 0.0, %v750
      %v752 = vpop.f32.mrb[0].mxu0
      %753 = vmatprep.mubr.bf16.mxu0 %v380
      %754 = vmatmul.mubr.bf16.gmra.mrb[0].mxu0 %v379
      %v755 = vpop.f32.mrb[0].mxu0
      %v756 = vadd.f32 0.0, %v755
      %v757 = vpop.f32.mrb[0].mxu0
      %v758 = vpop.f32.mrb[0].mxu0
      %v759 = vadd.f32 0.0, %v758
      %v760 = vpop.f32.mrb[0].mxu0
      %761 = vmatprep.mubr.bf16.mxu0 %v383
      %762 = vmatmul.mubr.bf16.gmra.mrb[0].mxu0 %v382
      %v763 = vpop.f32.mrb[0].mxu0
      %v764 = vadd.f32 0.0, %v763
      %v765 = vpop.f32.mrb[0].mxu0
      %v766 = vpop.f32.mrb[0].mxu0
      %v767 = vadd.f32 0.0, %v766
      %v768 = vpop.f32.mrb[0].mxu0
      %769 = vdwg.mxu0
      %770 = vmatprep.subr.bf16.mxu0 0
      %771 = vmatpush1.bf16.msra.mxu0 %v577
      %772 = vmatprep.subr.bf16.mxu0 0
      %773 = vmatpush1.bf16.msra.mxu0 %v578
      %774 = vmatprep.subr.bf16.mxu0 0
      %775 = vmatpush1.bf16.msra.mxu0 %v579
      %776 = vmatprep.subr.bf16.mxu0 0
      %777 = vmatpush1.bf16.msra.mxu0 %v580
      %778 = vmatprep.subr.bf16.mxu0 0
      %779 = vmatpush1.bf16.msra.mxu0 %v581
      %780 = vmatprep.subr.bf16.mxu0 0
      %781 = vmatpush1.bf16.msra.mxu0 %v582
      %782 = vmatprep.subr.bf16.mxu0 0
      %783 = vmatpush1.bf16.msra.mxu0 %v583
      %784 = vmatprep.subr.bf16.mxu0 0
      %785 = vmatpush1.bf16.msra.mxu0 %v584
      %786 = vmatprep.subr.bf16.mxu0 0
      %787 = vmatpush1.bf16.msra.mxu0 0
      %788 = vmatprep.subr.bf16.mxu0 0
      %789 = vmatpush1.bf16.msra.mxu0 0
      %790 = vmatprep.subr.bf16.mxu0 0
      %791 = vmatpush1.bf16.msra.mxu0 0
      %792 = vmatprep.subr.bf16.mxu0 0
      %793 = vmatpush1.bf16.msra.mxu0 0
      %794 = vmatprep.subr.bf16.mxu0 0
      %795 = vmatpush1.bf16.msra.mxu0 0
      %796 = vmatprep.subr.bf16.mxu0 0
      %797 = vmatpush1.bf16.msra.mxu0 0
      %798 = vmatprep.subr.bf16.mxu0 0
      %799 = vmatpush1.bf16.msra.mxu0 0
      %800 = vmatprep.subr.bf16.mxu0 0
      %801 = vmatpush1.bf16.msra.mxu0 0
      %802 = vmatprep.mubr.bf16.mxu0 0
      %803 = vmatmul.mubr.bf16.gmra.mrb[0].mxu0 %v339
      %v804 = vpop.f32.mrb[0].mxu0
      %v805 = vadd.f32 %v644, %v804
      %v806 = vpop.f32.mrb[0].mxu0
      %v807 = vpop.f32.mrb[0].mxu0
      %v808 = vadd.f32 %v647, %v807
      %v809 = vpop.f32.mrb[0].mxu0
      %810 = vmatprep.mubr.bf16.mxu0 0
      %811 = vmatmul.mubr.bf16.gmra.mrb[0].mxu0 %v342
      %v812 = vpop.f32.mrb[0].mxu0
      %v813 = vadd.f32 %v652, %v812
      %v814 = vpop.f32.mrb[0].mxu0
      %v815 = vpop.f32.mrb[0].mxu0
      %v816 = vadd.f32 %v655, %v815
      %v817 = vpop.f32.mrb[0].mxu0
      %818 = vmatprep.mubr.bf16.mxu0 0
      %819 = vmatmul.mubr.bf16.gmra.mrb[0].mxu0 %v345
      %v820 = vpop.f32.mrb[0].mxu0
      %v821 = vadd.f32 %v660, %v820
      %v822 = vpop.f32.mrb[0].mxu0
      %v823 = vpop.f32.mrb[0].mxu0
      %v824 = vadd.f32 %v663, %v823
      %v825 = vpop.f32.mrb[0].mxu0
      %826 = vmatprep.mubr.bf16.mxu0 0
      %827 = vmatmul.mubr.bf16.gmra.mrb[0].mxu0 %v348
      %v828 = vpop.f32.mrb[0].mxu0
      %v829 = vadd.f32 %v668, %v828
      %v830 = vpop.f32.mrb[0].mxu0
      %v831 = vpop.f32.mrb[0].mxu0
      %v832 = vadd.f32 %v671, %v831
      %v833 = vpop.f32.mrb[0].mxu0
      %834 = vmatprep.mubr.bf16.mxu0 0
      %835 = vmatmul.mubr.bf16.gmra.mrb[0].mxu0 %v351
      %v836 = vpop.f32.mrb[0].mxu0
      %v837 = vadd.f32 %v676, %v836
      %v838 = vpop.f32.mrb[0].mxu0
      %v839 = vpop.f32.mrb[0].mxu0
      %v840 = vadd.f32 %v679, %v839
      %v841 = vpop.f32.mrb[0].mxu0
      %842 = vmatprep.mubr.bf16.mxu0 0
      %843 = vmatmul.mubr.bf16.gmra.mrb[0].mxu0 %v354
      %v844 = vpop.f32.mrb[0].mxu0
      %v845 = vadd.f32 %v684, %v844
      %v846 = vpop.f32.mrb[0].mxu0
      %v847 = vpop.f32.mrb[0].mxu0
      %v848 = vadd.f32 %v687, %v847
      %v849 = vpop.f32.mrb[0].mxu0
      %850 = vmatprep.mubr.bf16.mxu0 0
      %851 = vmatmul.mubr.bf16.gmra.mrb[0].mxu0 %v357
      %v852 = vpop.f32.mrb[0].mxu0
      %v853 = vadd.f32 %v692, %v852
      %v854 = vpop.f32.mrb[0].mxu0
      %v855 = vpop.f32.mrb[0].mxu0
      %v856 = vadd.f32 %v695, %v855
      %v857 = vpop.f32.mrb[0].mxu0
      %858 = vmatprep.mubr.bf16.mxu0 0
      %859 = vmatmul.mubr.bf16.gmra.mrb[0].mxu0 %v360
      %v860 = vpop.f32.mrb[0].mxu0
      %v861 = vadd.f32 %v700, %v860
      %v862 = vpop.f32.mrb[0].mxu0
      %v863 = vpop.f32.mrb[0].mxu0
      %v864 = vadd.f32 %v703, %v863
      %v865 = vpop.f32.mrb[0].mxu0
      %866 = vmatprep.mubr.bf16.mxu0 0
      %867 = vmatmul.mubr.bf16.gmra.mrb[0].mxu0 %v363
      %v868 = vpop.f32.mrb[0].mxu0
      %v869 = vadd.f32 %v708, %v868
      %v870 = vpop.f32.mrb[0].mxu0
      %v871 = vpop.f32.mrb[0].mxu0
      %v872 = vadd.f32 %v711, %v871
      %v873 = vpop.f32.mrb[0].mxu0
      %874 = vmatprep.mubr.bf16.mxu0 0
      %875 = vmatmul.mubr.bf16.gmra.mrb[0].mxu0 %v366
      %v876 = vpop.f32.mrb[0].mxu0
      %v877 = vadd.f32 %v716, %v876
      %v878 = vpop.f32.mrb[0].mxu0
      %v879 = vpop.f32.mrb[0].mxu0
      %v880 = vadd.f32 %v719, %v879
      %v881 = vpop.f32.mrb[0].mxu0
      %882 = vmatprep.mubr.bf16.mxu0 0
      %883 = vmatmul.mubr.bf16.gmra.mrb[0].mxu0 %v369
      %v884 = vpop.f32.mrb[0].mxu0
      %v885 = vadd.f32 %v724, %v884
      %v886 = vpop.f32.mrb[0].mxu0
      %v887 = vpop.f32.mrb[0].mxu0
      %v888 = vadd.f32 %v727, %v887
      %v889 = vpop.f32.mrb[0].mxu0
      %890 = vmatprep.mubr.bf16.mxu0 0
      %891 = vmatmul.mubr.bf16.gmra.mrb[0].mxu0 %v372
      %v892 = vpop.f32.mrb[0].mxu0
      %v893 = vadd.f32 %v732, %v892
      %v894 = vpop.f32.mrb[0].mxu0
      %v895 = vpop.f32.mrb[0].mxu0
      %v896 = vadd.f32 %v735, %v895
      %v897 = vpop.f32.mrb[0].mxu0
      %898 = vmatprep.mubr.bf16.mxu0 0
      %899 = vmatmul.mubr.bf16.gmra.mrb[0].mxu0 %v375
      %v900 = vpop.f32.mrb[0].mxu0
      %v901 = vadd.f32 %v740, %v900
      %v902 = vpop.f32.mrb[0].mxu0
      %v903 = vpop.f32.mrb[0].mxu0
      %v904 = vadd.f32 %v743, %v903
      %v905 = vpop.f32.mrb[0].mxu0
      %906 = vmatprep.mubr.bf16.mxu0 0
      %907 = vmatmul.mubr.bf16.gmra.mrb[0].mxu0 %v378
      %v908 = vpop.f32.mrb[0].mxu0
      %v909 = vadd.f32 %v748, %v908
      %v910 = vpop.f32.mrb[0].mxu0
      %v911 = vpop.f32.mrb[0].mxu0
      %v912 = vadd.f32 %v751, %v911
      %v913 = vpop.f32.mrb[0].mxu0
      %914 = vmatprep.mubr.bf16.mxu0 0
      %915 = vmatmul.mubr.bf16.gmra.mrb[0].mxu0 %v381
      %v916 = vpop.f32.mrb[0].mxu0
      %v917 = vadd.f32 %v756, %v916
      %v918 = vpop.f32.mrb[0].mxu0
      %v919 = vpop.f32.mrb[0].mxu0
      %v920 = vadd.f32 %v759, %v919
      %v921 = vpop.f32.mrb[0].mxu0
      %922 = vmatprep.mubr.bf16.mxu0 0
      %923 = vmatmul.mubr.bf16.gmra.mrb[0].mxu0 %v384
      %v924 = vpop.f32.mrb[0].mxu0
      %v925 = vadd.f32 %v764, %v924
      %v926 = vpop.f32.mrb[0].mxu0
      %v927 = vpop.f32.mrb[0].mxu0
      %v928 = vadd.f32 %v767, %v927
      %v929 = vpop.f32.mrb[0].mxu0
      %930 = vdwg.mxu0
      %v931 = vadd.f32 %v385, %v805
      %v932 = vadd.f32 %v386, %v808
      %v933 = vadd.f32 %v387, %v813
      %v934 = vadd.f32 %v388, %v816
      %v935 = vadd.f32 %v389, %v821
      %v936 = vadd.f32 %v390, %v824
      %v937 = vadd.f32 %v391, %v829
      %v938 = vadd.f32 %v392, %v832
      %v939 = vadd.f32 %v393, %v837
      %v940 = vadd.f32 %v394, %v840
      %v941 = vadd.f32 %v395, %v845
      %v942 = vadd.f32 %v396, %v848
      %v943 = vadd.f32 %v397, %v853
      %v944 = vadd.f32 %v398, %v856
      %v945 = vadd.f32 %v399, %v861
      %v946 = vadd.f32 %v400, %v864
      %v947 = vadd.f32 %v401, %v869
      %v948 = vadd.f32 %v402, %v872
      %v949 = vadd.f32 %v403, %v877
      %v950 = vadd.f32 %v404, %v880
      %v951 = vadd.f32 %v405, %v885
      %v952 = vadd.f32 %v406, %v888
      %v953 = vadd.f32 %v407, %v893
      %v954 = vadd.f32 %v408, %v896
      %v955 = vadd.f32 %v409, %v901
      %v956 = vadd.f32 %v410, %v904
      %v957 = vadd.f32 %v411, %v909
      %v958 = vadd.f32 %v412, %v912
      %v959 = vadd.f32 %v413, %v917
      %v960 = vadd.f32 %v414, %v920
      %v961 = vadd.f32 %v415, %v925
      %v962 = vadd.f32 %v416, %v928
      %963 = vst [vmem:[#allocation2] sm:$0xff] %v931
      %964 = vst [vmem:[#allocation2 + $0x8] sm:$0xff] %v932
      %965 = vst [vmem:[#allocation2 + $0x10] sm:$0xff] %v933
      %966 = vst [vmem:[#allocation2 + $0x18] sm:$0xff] %v934
      %967 = vst [vmem:[#allocation2 + $0x20] sm:$0xff] %v935
      %968 = vst [vmem:[#allocation2 + $0x28] sm:$0xff] %v936
      %969 = vst [vmem:[#allocation2 + $0x30] sm:$0xff] %v937
      %970 = vst [vmem:[#allocation2 + $0x38] sm:$0xff] %v938
      %971 = vst [vmem:[#allocation2 + $0x40] sm:$0xff] %v939
      %972 = vst [vmem:[#allocation2 + $0x48] sm:$0xff] %v940
      %973 = vst [vmem:[#allocation2 + $0x50] sm:$0xff] %v941
      %974 = vst [vmem:[#allocation2 + $0x58] sm:$0xff] %v942
      %975 = vst [vmem:[#allocation2 + $0x60] sm:$0xff] %v943
      %976 = vst [vmem:[#allocation2 + $0x68] sm:$0xff] %v944
      %977 = vst [vmem:[#allocation2 + $0x70] sm:$0xff] %v945
      %978 = vst [vmem:[#allocation2 + $0x78] sm:$0xff] %v946
      %979 = vst [vmem:[#allocation2 + $0x80] sm:$0xff] %v947
      %980 = vst [vmem:[#allocation2 + $0x88] sm:$0xff] %v948
      %981 = vst [vmem:[#allocation2 + $0x90] sm:$0xff] %v949
      %982 = vst [vmem:[#allocation2 + $0x98] sm:$0xff] %v950
      %983 = vst [vmem:[#allocation2 + $0xa0] sm:$0xff] %v951
      %984 = vst [vmem:[#allocation2 + $0xa8] sm:$0xff] %v952
      %985 = vst [vmem:[#allocation2 + $0xb0] sm:$0xff] %v953
      %986 = vst [vmem:[#allocation2 + $0xb8] sm:$0xff] %v954
      %987 = vst [vmem:[#allocation2 + $0xc0] sm:$0xff] %v955
      %988 = vst [vmem:[#allocation2 + $0xc8] sm:$0xff] %v956
      %989 = vst [vmem:[#allocation2 + $0xd0] sm:$0xff] %v957
      %990 = vst [vmem:[#allocation2 + $0xd8] sm:$0xff] %v958
      %991 = vst [vmem:[#allocation2 + $0xe0] sm:$0xff] %v959
      %992 = vst [vmem:[#allocation2 + $0xe8] sm:$0xff] %v960
      %993 = vst [vmem:[#allocation2 + $0xf0] sm:$0xff] %v961
      %994 = vst [vmem:[#allocation2 + $0xf8] sm:$0xff] %v962
      // Predicated region
      $region41: #{gcn_layer_forward.3} parent=35 // pred_check
        %p995 = pneg %p277
      $region42: #{gcn_layer_forward.3} parent=35 // pred_check_branch
        %997 = sbr.rel (%p995) target = $region44
      $region43: #{gcn_layer_forward.3} parent=35 // pred_region
        %v998 = vld [vmem:[#allocation2] sm:$0xff]
        %v999 = vld [vmem:[#allocation2 + $0x8] sm:$0xff]
        %v1000 = vld [vmem:[#allocation2 + $0x10] sm:$0xff]
        %v1001 = vld [vmem:[#allocation2 + $0x18] sm:$0xff]
        %v1002 = vld [vmem:[#allocation2 + $0x20] sm:$0xff]
        %v1003 = vld [vmem:[#allocation2 + $0x28] sm:$0xff]
        %v1004 = vld [vmem:[#allocation2 + $0x30] sm:$0xff]
        %v1005 = vld [vmem:[#allocation2 + $0x38] sm:$0xff]
        %v1006 = vld [vmem:[#allocation2 + $0x40] sm:$0xff]
        %v1007 = vld [vmem:[#allocation2 + $0x48] sm:$0xff]
        %v1008 = vld [vmem:[#allocation2 + $0x50] sm:$0xff]
        %v1009 = vld [vmem:[#allocation2 + $0x58] sm:$0xff]
        %v1010 = vld [vmem:[#allocation2 + $0x60] sm:$0xff]
        %v1011 = vld [vmem:[#allocation2 + $0x68] sm:$0xff]
        %v1012 = vld [vmem:[#allocation2 + $0x70] sm:$0xff]
        %v1013 = vld [vmem:[#allocation2 + $0x78] sm:$0xff]
        %v1014 = vld [vmem:[#allocation2 + $0x80] sm:$0xff]
        %v1015 = vld [vmem:[#allocation2 + $0x88] sm:$0xff]
        %v1016 = vld [vmem:[#allocation2 + $0x90] sm:$0xff]
        %v1017 = vld [vmem:[#allocation2 + $0x98] sm:$0xff]
        %v1018 = vld [vmem:[#allocation2 + $0xa0] sm:$0xff]
        %v1019 = vld [vmem:[#allocation2 + $0xa8] sm:$0xff]
        %v1020 = vld [vmem:[#allocation2 + $0xb0] sm:$0xff]
        %v1021 = vld [vmem:[#allocation2 + $0xb8] sm:$0xff]
        %v1022 = vld [vmem:[#allocation2 + $0xc0] sm:$0xff]
        %v1023 = vld [vmem:[#allocation2 + $0xc8] sm:$0xff]
        %v1024 = vld [vmem:[#allocation2 + $0xd0] sm:$0xff]
        %v1025 = vld [vmem:[#allocation2 + $0xd8] sm:$0xff]
        %v1026 = vld [vmem:[#allocation2 + $0xe0] sm:$0xff]
        %v1027 = vld [vmem:[#allocation2 + $0xe8] sm:$0xff]
        %v1028 = vld [vmem:[#allocation2 + $0xf0] sm:$0xff]
        %v1029 = vld [vmem:[#allocation2 + $0xf8] sm:$0xff]
        %v1030 = vld [vmem:[%s268] sm:$0xff]
        %v1031 = vld [vmem:[%s268 + $0x8] sm:$0xff]
        %v1032 = vld [vmem:[%s268 + $0x10] sm:$0xff]
        %v1033 = vld [vmem:[%s268 + $0x18] sm:$0xff]
        %v1034 = vld [vmem:[%s268 + $0x20] sm:$0xff]
        %v1035 = vld [vmem:[%s268 + $0x28] sm:$0xff]
        %v1036 = vld [vmem:[%s268 + $0x30] sm:$0xff]
        %v1037 = vld [vmem:[%s268 + $0x38] sm:$0xff]
        %v1038 = vld [vmem:[%s268 + $0x40] sm:$0xff]
        %v1039 = vld [vmem:[%s268 + $0x48] sm:$0xff]
        %v1040 = vld [vmem:[%s268 + $0x50] sm:$0xff]
        %v1041 = vld [vmem:[%s268 + $0x58] sm:$0xff]
        %v1042 = vld [vmem:[%s268 + $0x60] sm:$0xff]
        %v1043 = vld [vmem:[%s268 + $0x68] sm:$0xff]
        %v1044 = vld [vmem:[%s268 + $0x70] sm:$0xff]
        %v1045 = vld [vmem:[%s268 + $0x78] sm:$0xff]
        %v1046 = vld [vmem:[%s268 + $0x80] sm:$0xff]
        %v1047 = vld [vmem:[%s268 + $0x88] sm:$0xff]
        %v1048 = vld [vmem:[%s268 + $0x90] sm:$0xff]
        %v1049 = vld [vmem:[%s268 + $0x98] sm:$0xff]
        %v1050 = vld [vmem:[%s268 + $0xa0] sm:$0xff]
        %v1051 = vld [vmem:[%s268 + $0xa8] sm:$0xff]
        %v1052 = vld [vmem:[%s268 + $0xb0] sm:$0xff]
        %v1053 = vld [vmem:[%s268 + $0xb8] sm:$0xff]
        %v1054 = vld [vmem:[%s268 + $0xc0] sm:$0xff]
        %v1055 = vld [vmem:[%s268 + $0xc8] sm:$0xff]
        %v1056 = vld [vmem:[%s268 + $0xd0] sm:$0xff]
        %v1057 = vld [vmem:[%s268 + $0xd8] sm:$0xff]
        %v1058 = vld [vmem:[%s268 + $0xe0] sm:$0xff]
        %v1059 = vld [vmem:[%s268 + $0xe8] sm:$0xff]
        %v1060 = vld [vmem:[%s268 + $0xf0] sm:$0xff]
        %v1061 = vld [vmem:[%s268 + $0xf8] sm:$0xff]
        %1063 = vset.pattern.permute.xlu0 0
        %1064 = vperm.xlu0 %1063, %v1030
        %v1065 = vpop.permute.xlu0 %1064
        %1068 = vset.pattern.permute.xlu0 0
        %1069 = vperm.xlu0 %1068, %v1031
        %v1070 = vpop.permute.xlu0 %1069
        %1073 = vset.pattern.permute.xlu0 0
        %1074 = vperm.xlu0 %1073, %v1032
        %v1075 = vpop.permute.xlu0 %1074
        %1078 = vset.pattern.permute.xlu0 0
        %1079 = vperm.xlu0 %1078, %v1033
        %v1080 = vpop.permute.xlu0 %1079
        %1083 = vset.pattern.permute.xlu0 0
        %1084 = vperm.xlu0 %1083, %v1034
        %v1085 = vpop.permute.xlu0 %1084
        %1088 = vset.pattern.permute.xlu0 0
        %1089 = vperm.xlu0 %1088, %v1035
        %v1090 = vpop.permute.xlu0 %1089
        %1093 = vset.pattern.permute.xlu0 0
        %1094 = vperm.xlu0 %1093, %v1036
        %v1095 = vpop.permute.xlu0 %1094
        %1098 = vset.pattern.permute.xlu0 0
        %1099 = vperm.xlu0 %1098, %v1037
        %v1100 = vpop.permute.xlu0 %1099
        %1103 = vset.pattern.permute.xlu0 0
        %1104 = vperm.xlu0 %1103, %v1038
        %v1105 = vpop.permute.xlu0 %1104
        %1108 = vset.pattern.permute.xlu0 0
        %1109 = vperm.xlu0 %1108, %v1039
        %v1110 = vpop.permute.xlu0 %1109
        %1113 = vset.pattern.permute.xlu0 0
        %1114 = vperm.xlu0 %1113, %v1040
        %v1115 = vpop.permute.xlu0 %1114
        %1118 = vset.pattern.permute.xlu0 0
        %1119 = vperm.xlu0 %1118, %v1041
        %v1120 = vpop.permute.xlu0 %1119
        %1123 = vset.pattern.permute.xlu0 0
        %1124 = vperm.xlu0 %1123, %v1042
        %v1125 = vpop.permute.xlu0 %1124
        %1128 = vset.pattern.permute.xlu0 0
        %1129 = vperm.xlu0 %1128, %v1043
        %v1130 = vpop.permute.xlu0 %1129
        %1133 = vset.pattern.permute.xlu0 0
        %1134 = vperm.xlu0 %1133, %v1044
        %v1135 = vpop.permute.xlu0 %1134
        %1138 = vset.pattern.permute.xlu0 0
        %1139 = vperm.xlu0 %1138, %v1045
        %v1140 = vpop.permute.xlu0 %1139
        %1143 = vset.pattern.permute.xlu0 0
        %1144 = vperm.xlu0 %1143, %v1046
        %v1145 = vpop.permute.xlu0 %1144
        %1148 = vset.pattern.permute.xlu0 0
        %1149 = vperm.xlu0 %1148, %v1047
        %v1150 = vpop.permute.xlu0 %1149
        %1153 = vset.pattern.permute.xlu0 0
        %1154 = vperm.xlu0 %1153, %v1048
        %v1155 = vpop.permute.xlu0 %1154
        %1158 = vset.pattern.permute.xlu0 0
        %1159 = vperm.xlu0 %1158, %v1049
        %v1160 = vpop.permute.xlu0 %1159
        %1163 = vset.pattern.permute.xlu0 0
        %1164 = vperm.xlu0 %1163, %v1050
        %v1165 = vpop.permute.xlu0 %1164
        %1168 = vset.pattern.permute.xlu0 0
        %1169 = vperm.xlu0 %1168, %v1051
        %v1170 = vpop.permute.xlu0 %1169
        %1173 = vset.pattern.permute.xlu0 0
        %1174 = vperm.xlu0 %1173, %v1052
        %v1175 = vpop.permute.xlu0 %1174
        %1178 = vset.pattern.permute.xlu0 0
        %1179 = vperm.xlu0 %1178, %v1053
        %v1180 = vpop.permute.xlu0 %1179
        %1183 = vset.pattern.permute.xlu0 0
        %1184 = vperm.xlu0 %1183, %v1054
        %v1185 = vpop.permute.xlu0 %1184
        %1188 = vset.pattern.permute.xlu0 0
        %1189 = vperm.xlu0 %1188, %v1055
        %v1190 = vpop.permute.xlu0 %1189
        %1193 = vset.pattern.permute.xlu0 0
        %1194 = vperm.xlu0 %1193, %v1056
        %v1195 = vpop.permute.xlu0 %1194
        %1198 = vset.pattern.permute.xlu0 0
        %1199 = vperm.xlu0 %1198, %v1057
        %v1200 = vpop.permute.xlu0 %1199
        %1203 = vset.pattern.permute.xlu0 0
        %1204 = vperm.xlu0 %1203, %v1058
        %v1205 = vpop.permute.xlu0 %1204
        %1208 = vset.pattern.permute.xlu0 0
        %1209 = vperm.xlu0 %1208, %v1059
        %v1210 = vpop.permute.xlu0 %1209
        %1213 = vset.pattern.permute.xlu0 0
        %1214 = vperm.xlu0 %1213, %v1060
        %v1215 = vpop.permute.xlu0 %1214
        %1218 = vset.pattern.permute.xlu0 0
        %1219 = vperm.xlu0 %1218, %v1061
        %v1220 = vpop.permute.xlu0 %1219
        %v1222 = vmul.f32 %v998, %v1065
        %v1223 = vmul.f32 %v999, %v1070
        %v1224 = vmul.f32 %v1000, %v1075
        %v1225 = vmul.f32 %v1001, %v1080
        %v1226 = vmul.f32 %v1002, %v1085
        %v1227 = vmul.f32 %v1003, %v1090
        %v1228 = vmul.f32 %v1004, %v1095
        %v1229 = vmul.f32 %v1005, %v1100
        %v1230 = vmul.f32 %v1006, %v1105
        %v1231 = vmul.f32 %v1007, %v1110
        %v1232 = vmul.f32 %v1008, %v1115
        %v1233 = vmul.f32 %v1009, %v1120
        %v1234 = vmul.f32 %v1010, %v1125
        %v1235 = vmul.f32 %v1011, %v1130
        %v1236 = vmul.f32 %v1012, %v1135
        %v1237 = vmul.f32 %v1013, %v1140
        %v1238 = vmul.f32 %v1014, %v1145
        %v1239 = vmul.f32 %v1015, %v1150
        %v1240 = vmul.f32 %v1016, %v1155
        %v1241 = vmul.f32 %v1017, %v1160
        %v1242 = vmul.f32 %v1018, %v1165
        %v1243 = vmul.f32 %v1019, %v1170
        %v1244 = vmul.f32 %v1020, %v1175
        %v1245 = vmul.f32 %v1021, %v1180
        %v1246 = vmul.f32 %v1022, %v1185
        %v1247 = vmul.f32 %v1023, %v1190
        %v1248 = vmul.f32 %v1024, %v1195
        %v1249 = vmul.f32 %v1025, %v1200
        %v1250 = vmul.f32 %v1026, %v1205
        %v1251 = vmul.f32 %v1027, %v1210
        %v1252 = vmul.f32 %v1028, %v1215
        %v1253 = vmul.f32 %v1029, %v1220
        %v1254 = vld [vmem:[%s3] sm:$0x1]
        %v1256 = vlaneseq
        %v1257 = vshrl.u32 %v1256, 7
        %v1258 = vsub.s32 0, %v1257
        %v1259 = vrot.slane %v1254, %v1258
        %v1261 = vadd.f32 %v1222, %v1259
        %v1262 = vadd.f32 %v1223, %v1259
        %v1263 = vadd.f32 %v1224, %v1259
        %v1264 = vadd.f32 %v1225, %v1259
        %v1265 = vadd.f32 %v1226, %v1259
        %v1266 = vadd.f32 %v1227, %v1259
        %v1267 = vadd.f32 %v1228, %v1259
        %v1268 = vadd.f32 %v1229, %v1259
        %v1269 = vadd.f32 %v1230, %v1259
        %v1270 = vadd.f32 %v1231, %v1259
        %v1271 = vadd.f32 %v1232, %v1259
        %v1272 = vadd.f32 %v1233, %v1259
        %v1273 = vadd.f32 %v1234, %v1259
        %v1274 = vadd.f32 %v1235, %v1259
        %v1275 = vadd.f32 %v1236, %v1259
        %v1276 = vadd.f32 %v1237, %v1259
        %v1277 = vadd.f32 %v1238, %v1259
        %v1278 = vadd.f32 %v1239, %v1259
        %v1279 = vadd.f32 %v1240, %v1259
        %v1280 = vadd.f32 %v1241, %v1259
        %v1281 = vadd.f32 %v1242, %v1259
        %v1282 = vadd.f32 %v1243, %v1259
        %v1283 = vadd.f32 %v1244, %v1259
        %v1284 = vadd.f32 %v1245, %v1259
        %v1285 = vadd.f32 %v1246, %v1259
        %v1286 = vadd.f32 %v1247, %v1259
        %v1287 = vadd.f32 %v1248, %v1259
        %v1288 = vadd.f32 %v1249, %v1259
        %v1289 = vadd.f32 %v1250, %v1259
        %v1290 = vadd.f32 %v1251, %v1259
        %v1291 = vadd.f32 %v1252, %v1259
        %v1292 = vadd.f32 %v1253, %v1259
        %v1293 = vmax.f32 %v1261, 0.0
        %v1294 = vmax.f32 %v1262, 0.0
        %v1295 = vmax.f32 %v1263, 0.0
        %v1296 = vmax.f32 %v1264, 0.0
        %v1297 = vmax.f32 %v1265, 0.0
        %v1298 = vmax.f32 %v1266, 0.0
        %v1299 = vmax.f32 %v1267, 0.0
        %v1300 = vmax.f32 %v1268, 0.0
        %v1301 = vmax.f32 %v1269, 0.0
        %v1302 = vmax.f32 %v1270, 0.0
        %v1303 = vmax.f32 %v1271, 0.0
        %v1304 = vmax.f32 %v1272, 0.0
        %v1305 = vmax.f32 %v1273, 0.0
        %v1306 = vmax.f32 %v1274, 0.0
        %v1307 = vmax.f32 %v1275, 0.0
        %v1308 = vmax.f32 %v1276, 0.0
        %v1309 = vmax.f32 %v1277, 0.0
        %v1310 = vmax.f32 %v1278, 0.0
        %v1311 = vmax.f32 %v1279, 0.0
        %v1312 = vmax.f32 %v1280, 0.0
        %v1313 = vmax.f32 %v1281, 0.0
        %v1314 = vmax.f32 %v1282, 0.0
        %v1315 = vmax.f32 %v1283, 0.0
        %v1316 = vmax.f32 %v1284, 0.0
        %v1317 = vmax.f32 %v1285, 0.0
        %v1318 = vmax.f32 %v1286, 0.0
        %v1319 = vmax.f32 %v1287, 0.0
        %v1320 = vmax.f32 %v1288, 0.0
        %v1321 = vmax.f32 %v1289, 0.0
        %v1322 = vmax.f32 %v1290, 0.0
        %v1323 = vmax.f32 %v1291, 0.0
        %v1324 = vmax.f32 %v1292, 0.0
        %v1325 = vpack.c.bf16 %v1294, %v1293
        %v1326 = vpack.c.bf16 %v1296, %v1295
        %v1327 = vpack.c.bf16 %v1298, %v1297
        %v1328 = vpack.c.bf16 %v1300, %v1299
        %v1329 = vpack.c.bf16 %v1302, %v1301
        %v1330 = vpack.c.bf16 %v1304, %v1303
        %v1331 = vpack.c.bf16 %v1306, %v1305
        %v1332 = vpack.c.bf16 %v1308, %v1307
        %v1333 = vpack.c.bf16 %v1310, %v1309
        %v1334 = vpack.c.bf16 %v1312, %v1311
        %v1335 = vpack.c.bf16 %v1314, %v1313
        %v1336 = vpack.c.bf16 %v1316, %v1315
        %v1337 = vpack.c.bf16 %v1318, %v1317
        %v1338 = vpack.c.bf16 %v1320, %v1319
        %v1339 = vpack.c.bf16 %v1322, %v1321
        %v1340 = vpack.c.bf16 %v1324, %v1323
        %v1357 = vunpack.c.l.b16 %v1325
        %v1358 = vunpack.c.h.b16 %v1325
        %v1359 = vunpack.c.l.b16 %v1326
        %v1360 = vunpack.c.h.b16 %v1326
        %v1361 = vunpack.c.l.b16 %v1327
        %v1362 = vunpack.c.h.b16 %v1327
        %v1363 = vunpack.c.l.b16 %v1328
        %v1364 = vunpack.c.h.b16 %v1328
        %v1365 = vunpack.c.l.b16 %v1329
        %v1366 = vunpack.c.h.b16 %v1329
        %v1367 = vunpack.c.l.b16 %v1330
        %v1368 = vunpack.c.h.b16 %v1330
        %v1369 = vunpack.c.l.b16 %v1331
        %v1370 = vunpack.c.h.b16 %v1331
        %v1371 = vunpack.c.l.b16 %v1332
        %v1372 = vunpack.c.h.b16 %v1332
        %v1373 = vunpack.c.l.b16 %v1333
        %v1374 = vunpack.c.h.b16 %v1333
        %v1375 = vunpack.c.l.b16 %v1334
        %v1376 = vunpack.c.h.b16 %v1334
        %v1377 = vunpack.c.l.b16 %v1335
        %v1378 = vunpack.c.h.b16 %v1335
        %v1379 = vunpack.c.l.b16 %v1336
        %v1380 = vunpack.c.h.b16 %v1336
        %v1381 = vunpack.c.l.b16 %v1337
        %v1382 = vunpack.c.h.b16 %v1337
        %v1383 = vunpack.c.l.b16 %v1338
        %v1384 = vunpack.c.h.b16 %v1338
        %v1385 = vunpack.c.l.b16 %v1339
        %v1386 = vunpack.c.h.b16 %v1339
        %v1387 = vunpack.c.l.b16 %v1340
        %v1388 = vunpack.c.h.b16 %v1340
        %v1389 = vpack.c.b16 %v1357, %v1357
        %v1390 = vpack.c.b16 %v1358, %v1358
        %v1391 = vpack.c.b16 %v1359, %v1359
        %v1392 = vpack.c.b16 %v1360, %v1360
        %v1393 = vpack.c.b16 %v1361, %v1361
        %v1394 = vpack.c.b16 %v1362, %v1362
        %v1395 = vpack.c.b16 %v1363, %v1363
        %v1396 = vpack.c.b16 %v1364, %v1364
        %v1397 = vpack.c.b16 %v1365, %v1365
        %v1398 = vpack.c.b16 %v1366, %v1366
        %v1399 = vpack.c.b16 %v1367, %v1367
        %v1400 = vpack.c.b16 %v1368, %v1368
        %v1401 = vpack.c.b16 %v1369, %v1369
        %v1402 = vpack.c.b16 %v1370, %v1370
        %v1403 = vpack.c.b16 %v1371, %v1371
        %v1404 = vpack.c.b16 %v1372, %v1372
        %v1405 = vpack.c.b16 %v1373, %v1373
        %v1406 = vpack.c.b16 %v1374, %v1374
        %v1407 = vpack.c.b16 %v1375, %v1375
        %v1408 = vpack.c.b16 %v1376, %v1376
        %v1409 = vpack.c.b16 %v1377, %v1377
        %v1410 = vpack.c.b16 %v1378, %v1378
        %v1411 = vpack.c.b16 %v1379, %v1379
        %v1412 = vpack.c.b16 %v1380, %v1380
        %v1413 = vpack.c.b16 %v1381, %v1381
        %v1414 = vpack.c.b16 %v1382, %v1382
        %v1415 = vpack.c.b16 %v1383, %v1383
        %v1416 = vpack.c.b16 %v1384, %v1384
        %v1417 = vpack.c.b16 %v1385, %v1385
        %v1418 = vpack.c.b16 %v1386, %v1386
        %v1419 = vpack.c.b16 %v1387, %v1387
        %v1420 = vpack.c.b16 %v1388, %v1388
        %1453 = vst [vmem:[%s274] sm:$0xf] %v1389
        %1454 = vst [vmem:[%s274 + $0x4] sm:$0xf] %v1390
        %1455 = vst [vmem:[%s274 + $0x8] sm:$0xf] %v1391
        %1456 = vst [vmem:[%s274 + $0xc] sm:$0xf] %v1392
        %1457 = vst [vmem:[%s274 + $0x10] sm:$0xf] %v1393
        %1458 = vst [vmem:[%s274 + $0x14] sm:$0xf] %v1394
        %1459 = vst [vmem:[%s274 + $0x18] sm:$0xf] %v1395
        %1460 = vst [vmem:[%s274 + $0x1c] sm:$0xf] %v1396
        %1461 = vst [vmem:[%s274 + $0x20] sm:$0xf] %v1397
        %1462 = vst [vmem:[%s274 + $0x24] sm:$0xf] %v1398
        %1463 = vst [vmem:[%s274 + $0x28] sm:$0xf] %v1399
        %1464 = vst [vmem:[%s274 + $0x2c] sm:$0xf] %v1400
        %1465 = vst [vmem:[%s274 + $0x30] sm:$0xf] %v1401
        %1466 = vst [vmem:[%s274 + $0x34] sm:$0xf] %v1402
        %1467 = vst [vmem:[%s274 + $0x38] sm:$0xf] %v1403
        %1468 = vst [vmem:[%s274 + $0x3c] sm:$0xf] %v1404
        %1469 = vst [vmem:[%s274 + $0x40] sm:$0xf] %v1405
        %1470 = vst [vmem:[%s274 + $0x44] sm:$0xf] %v1406
        %1471 = vst [vmem:[%s274 + $0x48] sm:$0xf] %v1407
        %1472 = vst [vmem:[%s274 + $0x4c] sm:$0xf] %v1408
        %1473 = vst [vmem:[%s274 + $0x50] sm:$0xf] %v1409
        %1474 = vst [vmem:[%s274 + $0x54] sm:$0xf] %v1410
        %1475 = vst [vmem:[%s274 + $0x58] sm:$0xf] %v1411
        %1476 = vst [vmem:[%s274 + $0x5c] sm:$0xf] %v1412
        %1477 = vst [vmem:[%s274 + $0x60] sm:$0xf] %v1413
        %1478 = vst [vmem:[%s274 + $0x64] sm:$0xf] %v1414
        %1479 = vst [vmem:[%s274 + $0x68] sm:$0xf] %v1415
        %1480 = vst [vmem:[%s274 + $0x6c] sm:$0xf] %v1416
        %1481 = vst [vmem:[%s274 + $0x70] sm:$0xf] %v1417
        %1482 = vst [vmem:[%s274 + $0x74] sm:$0xf] %v1418
        %1483 = vst [vmem:[%s274 + $0x78] sm:$0xf] %v1419
        %1484 = vst [vmem:[%s274 + $0x7c] sm:$0xf] %v1420
      $region44: #{gcn_layer_forward.3} parent=35 // pred_fallthru
        _
      %s1485 = smul.u32 32, %s19
      %p1486 = scmp.lt.s32.totalorder %s1485, 63
      %s1487 = scalar_select %p1486, %s1485, 63
      %s1488 = smul.addr %s1487, 4
      %s1489 = scalar_lea.vmem %s4, %s1488
      // Predicated region
      $region45: #{gcn_layer_forward.3} parent=35 // pred_check
        %p1490 = pneg %p146
      $region46: #{gcn_layer_forward.3} parent=35 // pred_check_branch
        %1492 = sbr.rel (%p1490) target = $region48
      $region47: #{gcn_layer_forward.3} parent=35 // pred_region
        %s1493 = smul.u32 32, %s19
      $region48: #{gcn_layer_forward.3} parent=35 // pred_fallthru
        _
    $region36: #{gcn_layer_forward.3} parent=5 // pred_fallthru
      _
    %p1494 = scmp.le.s32.totalorder 2, %s10
    // Predicated region
    $region49: #{gcn_layer_forward.3} parent=5 // pred_check
      %p1495 = pneg %p1494
    $region50: #{gcn_layer_forward.3} parent=5 // pred_check_branch
      %1497 = sbr.rel (%p1495) target = $region52
    $region51: #{gcn_layer_forward.3} parent=5 // pred_region
      %s1498 = ssub.s32 %s10, 2
      // Predicated region
      $region53: #{gcn_layer_forward.3} parent=51 // pred_check
        %p1499 = pneg %p152
      $region54: #{gcn_layer_forward.3} parent=51 // pred_check_branch
        %1501 = sbr.rel (%p1499) target = $region56
      $region55: #{gcn_layer_forward.3} parent=51 // pred_region
        %s1502 = smul.u32 32, %s21
        %p1503 = scmp.lt.s32.totalorder %s1502, 63
        %s1504 = scalar_select %p1503, %s1502, 63
        %s1505 = smul.addr %s1504, 4
        %s1506 = scalar_lea.vmem %s4, %s1505
      $region56: #{gcn_layer_forward.3} parent=51 // pred_fallthru
        _
    $region52: #{gcn_layer_forward.3} parent=5 // pred_fallthru
      _
  $region6: #{gcn_layer_forward.3} parent=0 // loop_footer
    %s14 = sadd.s32 1, %s10
  $region7: #{gcn_layer_forward.3} parent=0 // loop_footer_branch
    %9 = sbr.rel target = $region3
  $region8: #{gcn_layer_forward.3} parent=0 // loop_exit
    _

</llo_original>
